<compile_context>
chip_gen: v5e
topology: v5e:2x2
jax: 0.10.0
libtpu: 0.0.40
codegen_flags: <defaults>
</compile_context>

<pallas_src>
import math
from functools import partial

import jax
import jax.numpy as jnp
from jax import lax
from jax.experimental import pallas as pl
from jax.experimental.pallas import tpu as pltpu


ROW_TILE = 64  # row-block for the row-wise kernels (rows = B*S)


def _round_up(x, m):
    return (x + m - 1) // m * m


# ---------------------------------------------------------------------------
# Kernel 1: adaLN modulation + modulate(x, shift_msa, scale_msa) + QKV proj.
# ---------------------------------------------------------------------------
def pre_attn_kernel(ctx_ref, x_ref, wmod_ref, bmod_ref, wqkv_ref,
                    qkv_ref, modrest_ref):
    e = x_ref.shape[-1]
    c = ctx_ref[...].astype(jnp.float32)
    c = c * jax.nn.sigmoid(c)                                   # SiLU
    mod = jnp.dot(c.astype(jnp.bfloat16), wmod_ref[...],
                  preferred_element_type=jnp.float32) + bmod_ref[...]
    shift_msa = mod[:, 0 * e:1 * e]
    scale_msa = mod[:, 1 * e:2 * e]
    modrest_ref[...] = mod[:, 2 * e:]        # gate_msa, shift/scale/gate_mlp

    x = x_ref[...].astype(jnp.float32)
    xm = x * (1.0 + scale_msa) + shift_msa
    qkv_ref[...] = jnp.dot(xm.astype(jnp.bfloat16), wqkv_ref[...],
                           preferred_element_type=jnp.float32)


def pre_attn(context, x, wmod_t, bmod, wqkv_perm_t):
    r, e = x.shape
    d_mod = wmod_t.shape[1]
    d_qkv = wqkv_perm_t.shape[1]
    tm = min(ROW_TILE, _round_up(r, 8))
    r_pad = _round_up(r, tm)
    if r_pad != r:
        pad = ((0, r_pad - r), (0, 0))
        context = jnp.pad(context, pad)
        x = jnp.pad(x, pad)
    qkv, mod_rest = pl.pallas_call(
        pre_attn_kernel,
        out_shape=(jax.ShapeDtypeStruct((r_pad, d_qkv), jnp.float32),
                   jax.ShapeDtypeStruct((r_pad, d_mod - 2 * e), jnp.float32)),
        grid=(r_pad // tm,),
        in_specs=[
            pl.BlockSpec((tm, e), lambda i: (i, 0)),
            pl.BlockSpec((tm, e), lambda i: (i, 0)),
            pl.BlockSpec((e, d_mod), lambda i: (0, 0)),
            pl.BlockSpec((1, d_mod), lambda i: (0, 0)),
            pl.BlockSpec((e, d_qkv), lambda i: (0, 0)),
        ],
        out_specs=(pl.BlockSpec((tm, d_qkv), lambda i: (i, 0)),
                   pl.BlockSpec((tm, d_mod - 2 * e), lambda i: (i, 0))),
        compiler_params=pltpu.CompilerParams(
            dimension_semantics=("parallel",)),
    )(context.astype(jnp.float32), x.astype(jnp.float32),
      wmod_t.astype(jnp.bfloat16), bmod.reshape(1, d_mod).astype(jnp.float32),
      wqkv_perm_t.astype(jnp.bfloat16))
    return qkv[:r], mod_rest[:r]


# ---------------------------------------------------------------------------
# Kernel 2: fused RoPE + causal softmax attention, one (batch, head) per step.
# q/k arrive in per-head [even | odd] layout (see _permute_qk_columns).
# ---------------------------------------------------------------------------
def attn_kernel(q_ref, k_ref, v_ref, cos_ref, sin_ref, o_ref):
    q = q_ref[...].astype(jnp.float32)          # (S, hd)  permuted layout
    k = k_ref[...].astype(jnp.float32)
    v = v_ref[...].astype(jnp.float32)          # (S, hd)  original layout
    cos = cos_ref[...]
    sin = sin_ref[...]
    s_len, hd = q.shape
    half = hd // 2

    qf, qs = q[:, :half], q[:, half:]
    kf, ks = k[:, :half], k[:, half:]
    qrf = qf * cos - qs * sin
    qrs = qs * cos + qf * sin
    krf = kf * cos - ks * sin
    krs = ks * cos + kf * sin

    scale = 1.0 / math.sqrt(hd)
    scores = (jnp.dot(qrf.astype(jnp.bfloat16), krf.astype(jnp.bfloat16).T,
                      preferred_element_type=jnp.float32)
              + jnp.dot(qrs.astype(jnp.bfloat16), krs.astype(jnp.bfloat16).T,
                        preferred_element_type=jnp.float32)) * scale

    row = lax.broadcasted_iota(jnp.int32, (s_len, s_len), 0)
    col = lax.broadcasted_iota(jnp.int32, (s_len, s_len), 1)
    scores = jnp.where(col <= row, scores, -1e30)

    m = jnp.max(scores, axis=-1, keepdims=True)
    p = jnp.exp(scores - m)
    p = p / jnp.sum(p, axis=-1, keepdims=True)

    o = jnp.dot(p.astype(jnp.bfloat16), v.astype(jnp.bfloat16),
                preferred_element_type=jnp.float32)
    o_ref[...] = o.astype(o_ref.dtype)


def attention(qkv, cos, sin, b, s, n_head, n_kv_heads, head_dim):
    e = n_head * head_dim
    n_rep = n_head // n_kv_heads
    qkv = qkv.reshape(b, s, -1)
    q = qkv[..., :e].reshape(b, s, n_head, head_dim)
    k = qkv[..., e:e + n_kv_heads * head_dim].reshape(b, s, n_kv_heads, head_dim)
    v = qkv[..., e + n_kv_heads * head_dim:].reshape(b, s, n_kv_heads, head_dim)
    q = q.transpose(0, 2, 1, 3)        # (B, H,  S, hd)
    k = k.transpose(0, 2, 1, 3)        # (B, Hk, S, hd)
    v = v.transpose(0, 2, 1, 3)

    out = pl.pallas_call(
        attn_kernel,
        out_shape=jax.ShapeDtypeStruct((b, n_head, s, head_dim), jnp.float32),
        grid=(b, n_head),
        in_specs=[
            pl.BlockSpec((None, None, s, head_dim),
                         lambda bi, hi: (bi, hi, 0, 0)),
            pl.BlockSpec((None, None, s, head_dim),
                         lambda bi, hi: (bi, hi // n_rep, 0, 0)),
            pl.BlockSpec((None, None, s, head_dim),
                         lambda bi, hi: (bi, hi // n_rep, 0, 0)),
            pl.BlockSpec((s, head_dim // 2), lambda bi, hi: (0, 0)),
            pl.BlockSpec((s, head_dim // 2), lambda bi, hi: (0, 0)),
        ],
        out_specs=pl.BlockSpec((None, None, s, head_dim),
                               lambda bi, hi: (bi, hi, 0, 0)),
        compiler_params=pltpu.CompilerParams(
            dimension_semantics=("parallel", "parallel")),
    )(q, k, v, cos, sin)
    return out.transpose(0, 2, 1, 3).reshape(b * s, e)


# ---------------------------------------------------------------------------
# Kernel 3: proj + gate_msa + residual + RMSNorm_1 + modulate + gated MLP
#           + gate_mlp + residual + RMSNorm_2.
# ---------------------------------------------------------------------------
def post_attn_kernel(y_ref, x_ref, modrest_ref, wproj_ref, nw1_ref,
                     wg_ref, wu_ref, wd_ref, nw2_ref, out_ref, *, eps):
    e = x_ref.shape[-1]
    mod = modrest_ref[...]
    gate_msa = mod[:, 0 * e:1 * e]
    shift_mlp = mod[:, 1 * e:2 * e]
    scale_mlp = mod[:, 2 * e:3 * e]
    gate_mlp = mod[:, 3 * e:4 * e]

    x = x_ref[...].astype(jnp.float32)

    a = jnp.dot(y_ref[...].astype(jnp.bfloat16), wproj_ref[...],
                preferred_element_type=jnp.float32)
    r1 = a * gate_msa + x
    h1 = r1 * lax.rsqrt(jnp.mean(r1 * r1, axis=-1, keepdims=True) + eps)
    h1 = h1 * nw1_ref[...]

    xm = (h1 * (1.0 + scale_mlp) + shift_mlp).astype(jnp.bfloat16)
    u = jnp.dot(xm, wg_ref[...], preferred_element_type=jnp.float32)
    g = jnp.dot(xm, wu_ref[...], preferred_element_type=jnp.float32)
    h = (u * jax.nn.sigmoid(u) * g).astype(jnp.bfloat16)       # silu(u) * g

    d = jnp.dot(h, wd_ref[...], preferred_element_type=jnp.float32)
    r2 = d * gate_mlp + h1
    h2 = r2 * lax.rsqrt(jnp.mean(r2 * r2, axis=-1, keepdims=True) + eps)
    out_ref[...] = (h2 * nw2_ref[...]).astype(out_ref.dtype)


def post_attn(y, x, mod_rest, wproj_t, nw1, wg_t, wu_t, wd_t, nw2, eps):
    r, e = x.shape
    i_dim = wg_t.shape[1]
    tm = min(ROW_TILE, _round_up(r, 8))
    r_pad = _round_up(r, tm)
    if r_pad != r:
        pad = ((0, r_pad - r), (0, 0))
        y = jnp.pad(y, pad)
        x = jnp.pad(x, pad)
        mod_rest = jnp.pad(mod_rest, pad)
    out = pl.pallas_call(
        partial(post_attn_kernel, eps=eps),
        out_shape=jax.ShapeDtypeStruct((r_pad, e), jnp.float32),
        grid=(r_pad // tm,),
        in_specs=[
            pl.BlockSpec((tm, e), lambda i: (i, 0)),
            pl.BlockSpec((tm, e), lambda i: (i, 0)),
            pl.BlockSpec((tm, 4 * e), lambda i: (i, 0)),
            pl.BlockSpec((e, e), lambda i: (0, 0)),
            pl.BlockSpec((1, e), lambda i: (0, 0)),
            pl.BlockSpec((e, i_dim), lambda i: (0, 0)),
            pl.BlockSpec((e, i_dim), lambda i: (0, 0)),
            pl.BlockSpec((i_dim, e), lambda i: (0, 0)),
            pl.BlockSpec((1, e), lambda i: (0, 0)),
        ],
        out_specs=pl.BlockSpec((tm, e), lambda i: (i, 0)),
        compiler_params=pltpu.CompilerParams(
            dimension_semantics=("parallel",)),
    )(y.astype(jnp.float32), x.astype(jnp.float32),
      mod_rest.astype(jnp.float32),
      wproj_t.astype(jnp.bfloat16), nw1.reshape(1, e).astype(jnp.float32),
      wg_t.astype(jnp.bfloat16), wu_t.astype(jnp.bfloat16),
      wd_t.astype(jnp.bfloat16), nw2.reshape(1, e).astype(jnp.float32))
    return out[:r]


# ---------------------------------------------------------------------------
# Wrapper utilities and full block forward.
# ---------------------------------------------------------------------------
def _permute_qk_columns(wqkv_t, n_head, n_kv_heads, head_dim):
    """Reorder each q/k head's columns from interleaved pairs to [even | odd]."""
    e_in = wqkv_t.shape[0]
    q_cols = n_head * head_dim
    k_cols = n_kv_heads * head_dim

    def perm(w):
        n = w.shape[1] // head_dim
        w = w.reshape(e_in, n, head_dim // 2, 2)
        return jnp.concatenate([w[..., 0], w[..., 1]],
                               axis=-1).reshape(e_in, n * head_dim)

    wq = perm(wqkv_t[:, :q_cols])
    wk = perm(wqkv_t[:, q_cols:q_cols + k_cols])
    wv = wqkv_t[:, q_cols + k_cols:]
    return jnp.concatenate([wq, wk, wv], axis=1)


def modulated_block_forward(x, context, freqs_cis, params, *,
                            n_head, n_kv_heads, eps):
    b, s, e = x.shape
    head_dim = e // n_head
    cos = freqs_cis[:, 0, :, 0]          # (S, hd//2)
    sin = freqs_cis[:, 0, :, 1]
    wqkv_perm = _permute_qk_columns(params["wqkv_t"], n_head, n_kv_heads,
                                    head_dim)
    x2d = x.reshape(b * s, e)
    ctx2d = context.reshape(b * s, e)

    qkv, mod_rest = pre_attn(ctx2d, x2d, params["wmod_t"], params["bmod"],
                             wqkv_perm)
    y = attention(qkv, cos, sin, b, s, n_head, n_kv_heads, head_dim)
    out = post_attn(y, x2d, mod_rest, params["wproj_t"], params["norm1_w"],
                    params["wg_t"], params["wu_t"], params["wd_t"],
                    params["norm2_w"], eps)
    return out.reshape(b, s, e)


# ---------------------------------------------------------------------------
# Pure-JAX reference mirroring the PyTorch forward (f32 everywhere).
# ---------------------------------------------------------------------------
def reference_forward(x, context, freqs_cis, params, *, n_head, n_kv_heads, eps):
    b, s, e = x.shape
    head_dim = e // n_head
    n_rep = n_head // n_kv_heads

    def silu(v):
        return v * jax.nn.sigmoid(v)

    def rmsnorm(v, w):
        return v * lax.rsqrt(jnp.mean(v * v, -1, keepdims=True) + eps) * w

    def modulate(v, sh, sc):
        return v * (1.0 + sc) + sh

    ctx = silu(context) @ params["wmod_t"] + params["bmod"]
    (shift_msa, scale_msa, gate_msa,
     shift_mlp, scale_mlp, gate_mlp) = jnp.split(ctx, 6, axis=-1)

    def attn(xin):
        qkv = xin @ params["wqkv_t"]
        q = qkv[..., :e].reshape(b, s, n_head, head_dim)
        k = qkv[..., e:e + n_kv_heads * head_dim].reshape(b, s, n_kv_heads,
                                                          head_dim)
        v = qkv[..., e + n_kv_heads * head_dim:].reshape(b, s, n_kv_heads,
                                                         head_dim)
        k = jnp.repeat(k, n_rep, axis=2)
        v = jnp.repeat(v, n_rep, axis=2)
        # apply_rotary_emb_complex_like (interleaved pairs)
        qk = jnp.concatenate([q, k], axis=2).reshape(b, s, 2 * n_head,
                                                     head_dim // 2, 2)
        fc = freqs_cis                                   # (S, 1, hd//2, 2)
        rot = jnp.stack([qk[..., 0] * fc[..., 0] - qk[..., 1] * fc[..., 1],
                         qk[..., 1] * fc[..., 0] + qk[..., 0] * fc[..., 1]], -1)
        rot = rot.reshape(b, s, 2 * n_head, head_dim)
        q, k = rot[:, :, :n_head], rot[:, :, n_head:]
        q = q.transpose(0, 2, 1, 3)
        k = k.transpose(0, 2, 1, 3)
        vv = v.transpose(0, 2, 1, 3)
        scores = jnp.einsum("bhqd,bhkd->bhqk", q, k) / math.sqrt(head_dim)
        causal = jnp.tril(jnp.ones((s, s), dtype=bool))
        scores = jnp.where(causal[None, None], scores, -1e30)
        p = jax.nn.softmax(scores, axis=-1)
        y = jnp.einsum("bhqk,bhkd->bhqd", p, vv)
        y = y.transpose(0, 2, 1, 3).reshape(b, s, e)
        return y @ params["wproj_t"]

    def mlp(xin):
        u = xin @ params["wg_t"]
        g = xin @ params["wu_t"]
        return (silu(u) * g) @ params["wd_t"]

    x1 = rmsnorm(attn(modulate(x, shift_msa, scale_msa)) * gate_msa + x,
                 params["norm1_w"])
    x2 = rmsnorm(mlp(modulate(x1, shift_mlp, scale_mlp)) * gate_mlp + x1,
                 params["norm2_w"])
    return x2


def make_freqs_cis(s, head_dim, base=10000.0):
    half = head_dim // 2
    freqs = 1.0 / (base ** (jnp.arange(0, half, dtype=jnp.float32) * 2.0
                            / head_dim))
    t = jnp.arange(s, dtype=jnp.float32)
    angles = jnp.outer(t, freqs)                        # (S, half)
    return jnp.stack([jnp.cos(angles), jnp.sin(angles)], axis=-1)[:, None]


if __name__ == "__main__":
    B, S, E = 2, 64, 128
    N_HEAD, N_KV_HEADS = 4, 2
    HEAD_DIM = E // N_HEAD
    I_DIM = 256
    EPS = 1e-6
    SCALE = 0.1

    key = jax.random.PRNGKey(0)
    ks = jax.random.split(key, 12)
    x = jax.random.normal(ks[0], (B, S, E), jnp.float32)
    context = jax.random.normal(ks[1], (B, S, E), jnp.float32)

    d_qkv = (N_HEAD + 2 * N_KV_HEADS) * HEAD_DIM
    params = {
        # dense weights stored pre-transposed as (in, out): y = x @ W_t (+ b)
        "wmod_t": jax.random.normal(ks[2], (E, 6 * E), jnp.float32) * SCALE,
        "bmod": jax.random.normal(ks[3], (6 * E,), jnp.float32) * SCALE,
        "wqkv_t": jax.random.normal(ks[4], (E, d_qkv), jnp.float32) * SCALE,
        "wproj_t": jax.random.normal(ks[5], (E, E), jnp.float32) * SCALE,
        "wg_t": jax.random.normal(ks[6], (E, I_DIM), jnp.float32) * SCALE,
        "wu_t": jax.random.normal(ks[7], (E, I_DIM), jnp.float32) * SCALE,
        "wd_t": jax.random.normal(ks[8], (I_DIM, E), jnp.float32) * SCALE,
        "norm1_w": jnp.ones((E,), jnp.float32),
        "norm2_w": jnp.ones((E,), jnp.float32),
    }
    freqs_cis = make_freqs_cis(S, HEAD_DIM)

    out = modulated_block_forward(x, context, freqs_cis, params,
                                  n_head=N_HEAD, n_kv_heads=N_KV_HEADS,
                                  eps=EPS)
    out = jax.block_until_ready(out)

    ref = reference_forward(x, context, freqs_cis, params,
                            n_head=N_HEAD, n_kv_heads=N_KV_HEADS, eps=EPS)
    assert out.shape == (B, S, E)
    # bf16 MXU feeds with f32 accumulation -> loosened tolerance vs f32 ref.
    assert jnp.allclose(out, ref, atol=5e-2, rtol=5e-2), \
        float(jnp.max(jnp.abs(out - ref)))
    print("KERNEL_OK")
</pallas_src>

<mosaic_0001>
module attributes {stable_mosaic.version = 11 : i64} {
  func.func @pre_attn_kernel(%arg0: i32, %arg1: memref<64x128xf32, #tpu.memory_space<vmem>>, %arg2: memref<64x128xf32, #tpu.memory_space<vmem>>, %arg3: memref<128x768xbf16, #tpu.memory_space<vmem>>, %arg4: memref<1x768xf32, #tpu.memory_space<vmem>>, %arg5: memref<128x256xbf16, #tpu.memory_space<vmem>>, %arg6: memref<64x256xf32, #tpu.memory_space<vmem>>, %arg7: memref<64x512xf32, #tpu.memory_space<vmem>>) attributes {dimension_semantics = [#tpu.dimension_semantics<parallel>], iteration_bounds = array<i64: 2>, scalar_prefetch = 0 : i64, scratch_operands = 0 : i64, tpu.core_type = #tpu.core_type<tc>, window_params = [{transform_indices = @transform_0, window_bounds = array<i64: 64, 128>}, {transform_indices = @transform_1, window_bounds = array<i64: 64, 128>}, {pipeline_mode = #tpu.pipeline_mode<synchronous>, transform_indices = @transform_2, window_bounds = array<i64: 128, 768>}, {pipeline_mode = #tpu.pipeline_mode<synchronous>, transform_indices = @transform_3, window_bounds = array<i64: 1, 768>}, {pipeline_mode = #tpu.pipeline_mode<synchronous>, transform_indices = @transform_4, window_bounds = array<i64: 128, 256>}, {transform_indices = @transform_5, window_bounds = array<i64: 64, 256>}, {transform_indices = @transform_6, window_bounds = array<i64: 64, 512>}]} {
    %c0 = arith.constant 0 : index
    %c0_0 = arith.constant 0 : index
    %0 = vector.load %arg1[%c0, %c0_0] : memref<64x128xf32, #tpu.memory_space<vmem>>, vector<64x128xf32>
    %1 = arith.negf %0 : vector<64x128xf32>
    %2 = math.exp %1 : vector<64x128xf32>
    %cst = arith.constant 1.000000e+00 : f32
    %3 = vector.broadcast %cst : f32 to vector<64x128xf32>
    %4 = arith.addf %3, %2 : vector<64x128xf32>
    %5 = arith.divf %3, %4 : vector<64x128xf32>
    %6 = arith.mulf %0, %5 : vector<64x128xf32>
    %7 = arith.truncf %6 : vector<64x128xf32> to vector<64x128xbf16>
    %c0_1 = arith.constant 0 : index
    %c0_2 = arith.constant 0 : index
    %8 = vector.load %arg3[%c0_1, %c0_2] : memref<128x768xbf16, #tpu.memory_space<vmem>>, vector<128x768xbf16>
    %cst_3 = arith.constant dense<0.000000e+00> : vector<64x768xf32>
    %9 = tpu.matmul %7, %8, %cst_3 {dimension_numbers = #tpu.dot_dimension_numbers<[1], [0], [0], [1], [0, 0, 1, 1], [], []>} : vector<64x128xbf16>, vector<128x768xbf16>, vector<64x768xf32> -> vector<64x768xf32>
    %c0_4 = arith.constant 0 : index
    %c0_5 = arith.constant 0 : index
    %10 = vector.load %arg4[%c0_4, %c0_5] : memref<1x768xf32, #tpu.memory_space<vmem>>, vector<1x768xf32>
    %11 = vector.broadcast %10 : vector<1x768xf32> to vector<64x768xf32>
    %12 = arith.addf %9, %11 : vector<64x768xf32>
    %13 = vector.extract_strided_slice %12 {offsets = [0, 0], sizes = [64, 128], strides = [1, 1]} : vector<64x768xf32> to vector<64x128xf32>
    %14 = vector.extract_strided_slice %12 {offsets = [0, 128], sizes = [64, 128], strides = [1, 1]} : vector<64x768xf32> to vector<64x128xf32>
    %15 = vector.extract_strided_slice %12 {offsets = [0, 256], sizes = [64, 512], strides = [1, 1]} : vector<64x768xf32> to vector<64x512xf32>
    %c0_6 = arith.constant 0 : index
    %c0_7 = arith.constant 0 : index
    %16 = vector.load %arg7[%c0_6, %c0_7] : memref<64x512xf32, #tpu.memory_space<vmem>>, vector<64x512xf32>
    tpu.vector_store %arg7[%c0_6, %c0_7], %15 {strides = array<i32>} : memref<64x512xf32, #tpu.memory_space<vmem>>, vector<64x512xf32>,
    %c0_8 = arith.constant 0 : index
    %c0_9 = arith.constant 0 : index
    %17 = vector.load %arg2[%c0_8, %c0_9] : memref<64x128xf32, #tpu.memory_space<vmem>>, vector<64x128xf32>
    %cst_10 = arith.constant 1.000000e+00 : f32
    %18 = vector.broadcast %cst_10 : f32 to vector<64x128xf32>
    %19 = arith.addf %18, %14 : vector<64x128xf32>
    %20 = arith.mulf %17, %19 : vector<64x128xf32>
    %21 = arith.addf %20, %13 : vector<64x128xf32>
    %22 = arith.truncf %21 : vector<64x128xf32> to vector<64x128xbf16>
    %c0_11 = arith.constant 0 : index
    %c0_12 = arith.constant 0 : index
    %23 = vector.load %arg5[%c0_11, %c0_12] : memref<128x256xbf16, #tpu.memory_space<vmem>>, vector<128x256xbf16>
    %cst_13 = arith.constant dense<0.000000e+00> : vector<64x256xf32>
    %24 = tpu.matmul %22, %23, %cst_13 {dimension_numbers = #tpu.dot_dimension_numbers<[1], [0], [0], [1], [0, 0, 1, 1], [], []>} : vector<64x128xbf16>, vector<128x256xbf16>, vector<64x256xf32> -> vector<64x256xf32>
    %c0_14 = arith.constant 0 : index
    %c0_15 = arith.constant 0 : index
    %25 = vector.load %arg6[%c0_14, %c0_15] : memref<64x256xf32, #tpu.memory_space<vmem>>, vector<64x256xf32>
    tpu.vector_store %arg6[%c0_14, %c0_15], %24 {strides = array<i32>} : memref<64x256xf32, #tpu.memory_space<vmem>>, vector<64x256xf32>,
    return
  }
  func.func @transform_0(%arg0: i32) -> (i32, i32) {
    %c0_i32 = arith.constant 0 : i32
    %c0_i32_0 = arith.constant 0 : i32
    return %arg0, %c0_i32 : i32, i32
  }
  func.func @transform_1(%arg0: i32) -> (i32, i32) {
    %c0_i32 = arith.constant 0 : i32
    %c0_i32_0 = arith.constant 0 : i32
    return %arg0, %c0_i32 : i32, i32
  }
  func.func @transform_2(%arg0: i32) -> (i32, i32) {
    %c0_i32 = arith.constant 0 : i32
    %c0_i32_0 = arith.constant 0 : i32
    %c0_i32_1 = arith.constant 0 : i32
    return %c0_i32, %c0_i32_0 : i32, i32
  }
  func.func @transform_3(%arg0: i32) -> (i32, i32) {
    %c0_i32 = arith.constant 0 : i32
    %c0_i32_0 = arith.constant 0 : i32
    %c0_i32_1 = arith.constant 0 : i32
    return %c0_i32, %c0_i32_0 : i32, i32
  }
  func.func @transform_4(%arg0: i32) -> (i32, i32) {
    %c0_i32 = arith.constant 0 : i32
    %c0_i32_0 = arith.constant 0 : i32
    %c0_i32_1 = arith.constant 0 : i32
    return %c0_i32, %c0_i32_0 : i32, i32
  }
  func.func @transform_5(%arg0: i32) -> (i32, i32) {
    %c0_i32 = arith.constant 0 : i32
    %c0_i32_0 = arith.constant 0 : i32
    return %arg0, %c0_i32 : i32, i32
  }
  func.func @transform_6(%arg0: i32) -> (i32, i32) {
    %c0_i32 = arith.constant 0 : i32
    %c0_i32_0 = arith.constant 0 : i32
    return %arg0, %c0_i32 : i32, i32
  }
}

</mosaic_0001>

<llo_original>
// kernel: tpu_custom_call.1
$region0: #{tpu_custom_call.1}
  #allocation0 [shape = 'u32[]', space=smem, size = 0x4, offset = 0x4, fixed_abs, tag = 'smem constant byte address 0x4 - core index']
  #allocation1 [shape = 'u32[72,128]{1,0:T(1,128)}', space=vmem, size = 0x9000, scoped, tag = 'internal scratch']
  %s0 = inlined_call_operand.hbm [shape: f32[128,128], index: 0, kind: input, shape index: {}]
  %s1 = inlined_call_operand.hbm [shape: f32[128,128], index: 1, kind: input, shape index: {}]
  %s2 = inlined_call_operand.hbm [shape: bf16[128,768], index: 2, kind: input, shape index: {}]
  %s3 = inlined_call_operand.hbm [shape: f32[1,768], index: 3, kind: input, shape index: {}]
  %s4 = inlined_call_operand.hbm [shape: bf16[128,256], index: 4, kind: input, shape index: {}]
  %s5 = inlined_call_operand.hbm [shape: f32[128,256], index: 5, kind: output, shape index: {0}]
  %s6 = inlined_call_operand.hbm [shape: f32[128,512], index: 6, kind: output, shape index: {1}]
  %7 = xla_tuple %s5, %s6
  %s8 = sld [smem:[#allocation0]]
  $region81: #{tpu_custom_call.1} parent=0
    _
  %s10 = ssub.s32 1, %s8
  %s11 = scalar_select 0, %s10, %s8
  $region1: #{tpu_custom_call.1} parent=0
    #allocation2 [shape = 'u8[65536]{0}', space=vmem, size = 0x10000, scoped, tag = 'input window, operand 0']
    #allocation3 [shape = 's32[2]{0}', space=sflag, size = 0x8, scoped, tag = 'scoped memory for tpu_custom_call.1']
    #allocation4 [shape = 's32[2]{0}', space=sflag, size = 0x8, scoped, tag = 'scoped memory for tpu_custom_call.1']
    #allocation5 [shape = 'u8[65536]{0}', space=vmem, size = 0x10000, scoped, tag = 'input window, operand 1']
    #allocation6 [shape = 's32[2]{0}', space=sflag, size = 0x8, scoped, tag = 'scoped memory for tpu_custom_call.1']
    #allocation7 [shape = 'u8[196608]{0}', space=vmem, size = 0x30000, scoped, tag = 'input window, operand 2, single buffered']
    #allocation8 [shape = 'u8[3072]{0}', space=vmem, size = 0xc00, scoped, tag = 'input window, operand 3, single buffered']
    #allocation9 [shape = 's32[1]{0}', space=sflag, size = 0x4, scoped, tag = 'scoped memory for tpu_custom_call.1']
    #allocation10 [shape = 'u8[65536]{0}', space=vmem, size = 0x10000, scoped, tag = 'input window, operand 4, single buffered']
    #allocation11 [shape = 'u8[131072]{0}', space=vmem, size = 0x20000, scoped, tag = 'output window, operand 0']
    #allocation12 [shape = 'u8[262144]{0}', space=vmem, size = 0x40000, scoped, tag = 'output window, operand 1']
    #allocation13 [shape = 's32[2]{0}', space=sflag, size = 0x8, scoped, tag = 'scoped memory for tpu_custom_call.1']
    %12 = vsyncpa [#allocation3], 0
    %s13 = scalar_lea.sflag [#allocation3], 1
    %14 = vsyncpa %s13, 0
    %15 = vsyncpa [#allocation6], 0
    %s16 = scalar_lea.sflag [#allocation6], 1
    %17 = vsyncpa %s16, 0
    %18 = vsyncpa [#allocation9], 0
    %19 = vsyncpa [#allocation4], 0
    %s20 = scalar_lea.sflag [#allocation4], 1
    %21 = vsyncpa %s20, 0
    %22 = vsyncpa [#allocation13], 0
    %s23 = scalar_lea.sflag [#allocation13], 1
    %24 = vsyncpa %s23, 0
    loop: start=0, step=1, limit=4
    $region2: #{tpu_custom_call.1} parent=1 // loop_pre_header
      _
    $region3: #{tpu_custom_call.1} parent=1 // loop_header
      %s26 = sphi 0, %s30
      %p27 = scmp.ge.s32.totalorder %s26, 4
      %s36 = sphi 0, %s38
      %s39 = sphi 0, %s36
      %s40 = sphi 0, %s39
      %s56 = sphi 0, %s40
      %s62 = sphi 0, %s64
      %s65 = sphi 0, %s62
      %s66 = sphi 0, %s65
      %s82 = sphi 0, %s66
      %s86 = sphi 0, %s86
      %s88 = sphi 0, %s86
      %s89 = sphi 0, %s88
      %s103 = sphi 0, %s89
      %s107 = sphi 0, %s107
      %s109 = sphi 0, %s107
      %s110 = sphi 0, %s109
      %s124 = sphi 0, %s110
      %s128 = sphi 0, %s128
      %s130 = sphi 0, %s128
      %s131 = sphi 0, %s130
      %s145 = sphi 0, %s131
      %s151 = sphi 0, %s153
      %s154 = sphi 0, %s151
      %s155 = sphi 0, %s154
      %s171 = sphi 0, %s155
      %s177 = sphi 0, %s179
      %s180 = sphi 0, %s177
      %s181 = sphi 0, %s180
      %s197 = sphi 0, %s181
    $region4: #{tpu_custom_call.1} parent=1 // loop_header_branch
      %29 = sbr.rel (%p27) target = $region8
    $region5: #{tpu_custom_call.1} parent=1 // loop_body
      %s31 = ssub.s32 %s26, 1
      %s32 = ssub.s32 %s26, 2
      %s33 = sadd.s32 %s26, 1
      %s34 = ssub.s32 %s26, %s33
      %p35 = scmp.eq.s32.totalorder %s34, 0
      %s37 = sadd.s32 %s36, 1
      %s38 = scalar_select %p35, %s36, %s37
      %p41 = pneg %p35
      %p42 = scmp.eq.s32.totalorder %s26, 1
      %p43 = por %p41, %p42
      %p44 = scmp.ne.s32.totalorder %s36, %s39
      %p45 = scmp.eq.s32.totalorder %s26, 0
      %p46 = por %p44, %p45
      %p47 = scmp.ne.s32.totalorder %s36, %s39
      %p48 = scmp.eq.s32.totalorder %s31, 1
      %p49 = por %p47, %p48
      %p50 = scmp.ne.s32.totalorder %s39, %s40
      %p51 = scmp.eq.s32.totalorder %s31, 0
      %p52 = por %p50, %p51
      %p53 = scmp.ne.s32.totalorder %s39, %s40
      %p54 = scmp.eq.s32.totalorder %s32, 1
      %p55 = por %p53, %p54
      %p57 = scmp.ne.s32.totalorder %s40, %s56
      %p58 = scmp.eq.s32.totalorder %s32, 0
      %p59 = por %p57, %p58
      %s60 = ssub.s32 %s26, %s33
      %p61 = scmp.eq.s32.totalorder %s60, 0
      %s63 = sadd.s32 %s62, 1
      %s64 = scalar_select %p61, %s62, %s63
      %p67 = pneg %p61
      %p68 = scmp.eq.s32.totalorder %s26, 1
      %p69 = por %p67, %p68
      %p70 = scmp.ne.s32.totalorder %s62, %s65
      %p71 = scmp.eq.s32.totalorder %s26, 0
      %p72 = por %p70, %p71
      %p73 = scmp.ne.s32.totalorder %s62, %s65
      %p74 = scmp.eq.s32.totalorder %s31, 1
      %p75 = por %p73, %p74
      %p76 = scmp.ne.s32.totalorder %s65, %s66
      %p77 = scmp.eq.s32.totalorder %s31, 0
      %p78 = por %p76, %p77
      %p79 = scmp.ne.s32.totalorder %s65, %s66
      %p80 = scmp.eq.s32.totalorder %s32, 1
      %p81 = por %p79, %p80
      %p83 = scmp.ne.s32.totalorder %s66, %s82
      %p84 = scmp.eq.s32.totalorder %s32, 0
      %p85 = por %p83, %p84
      %s87 = sadd.s32 %s86, 1
      %p90 = scmp.eq.s32.totalorder %s26, 1
      %p91 = scmp.ne.s32.totalorder %s86, %s88
      %p92 = scmp.eq.s32.totalorder %s26, 0
      %p93 = por %p91, %p92
      %p94 = scmp.ne.s32.totalorder %s86, %s88
      %p95 = scmp.eq.s32.totalorder %s31, 1
      %p96 = por %p94, %p95
      %p97 = scmp.ne.s32.totalorder %s88, %s89
      %p98 = scmp.eq.s32.totalorder %s31, 0
      %p99 = por %p97, %p98
      %p100 = scmp.ne.s32.totalorder %s88, %s89
      %p101 = scmp.eq.s32.totalorder %s32, 1
      %p102 = por %p100, %p101
      %p104 = scmp.ne.s32.totalorder %s89, %s103
      %p105 = scmp.eq.s32.totalorder %s32, 0
      %p106 = por %p104, %p105
      %s108 = sadd.s32 %s107, 1
      %p111 = scmp.eq.s32.totalorder %s26, 1
      %p112 = scmp.ne.s32.totalorder %s107, %s109
      %p113 = scmp.eq.s32.totalorder %s26, 0
      %p114 = por %p112, %p113
      %p115 = scmp.ne.s32.totalorder %s107, %s109
      %p116 = scmp.eq.s32.totalorder %s31, 1
      %p117 = por %p115, %p116
      %p118 = scmp.ne.s32.totalorder %s109, %s110
      %p119 = scmp.eq.s32.totalorder %s31, 0
      %p120 = por %p118, %p119
      %p121 = scmp.ne.s32.totalorder %s109, %s110
      %p122 = scmp.eq.s32.totalorder %s32, 1
      %p123 = por %p121, %p122
      %p125 = scmp.ne.s32.totalorder %s110, %s124
      %p126 = scmp.eq.s32.totalorder %s32, 0
      %p127 = por %p125, %p126
      %s129 = sadd.s32 %s128, 1
      %p132 = scmp.eq.s32.totalorder %s26, 1
      %p133 = scmp.ne.s32.totalorder %s128, %s130
      %p134 = scmp.eq.s32.totalorder %s26, 0
      %p135 = por %p133, %p134
      %p136 = scmp.ne.s32.totalorder %s128, %s130
      %p137 = scmp.eq.s32.totalorder %s31, 1
      %p138 = por %p136, %p137
      %p139 = scmp.ne.s32.totalorder %s130, %s131
      %p140 = scmp.eq.s32.totalorder %s31, 0
      %p141 = por %p139, %p140
      %p142 = scmp.ne.s32.totalorder %s130, %s131
      %p143 = scmp.eq.s32.totalorder %s32, 1
      %p144 = por %p142, %p143
      %p146 = scmp.ne.s32.totalorder %s131, %s145
      %p147 = scmp.eq.s32.totalorder %s32, 0
      %p148 = por %p146, %p147
      %s149 = ssub.s32 %s26, %s33
      %p150 = scmp.eq.s32.totalorder %s149, 0
      %s152 = sadd.s32 %s151, 1
      %s153 = scalar_select %p150, %s151, %s152
      %p156 = pneg %p150
      %p157 = scmp.eq.s32.totalorder %s26, 1
      %p158 = por %p156, %p157
      %p159 = scmp.ne.s32.totalorder %s151, %s154
      %p160 = scmp.eq.s32.totalorder %s26, 0
      %p161 = por %p159, %p160
      %p162 = scmp.ne.s32.totalorder %s151, %s154
      %p163 = scmp.eq.s32.totalorder %s31, 1
      %p164 = por %p162, %p163
      %p165 = scmp.ne.s32.totalorder %s154, %s155
      %p166 = scmp.eq.s32.totalorder %s31, 0
      %p167 = por %p165, %p166
      %p168 = scmp.ne.s32.totalorder %s154, %s155
      %p169 = scmp.eq.s32.totalorder %s32, 1
      %p170 = por %p168, %p169
      %p172 = scmp.ne.s32.totalorder %s155, %s171
      %p173 = scmp.eq.s32.totalorder %s32, 0
      %p174 = por %p172, %p173
      %s175 = ssub.s32 %s26, %s33
      %p176 = scmp.eq.s32.totalorder %s175, 0
      %s178 = sadd.s32 %s177, 1
      %s179 = scalar_select %p176, %s177, %s178
      %p182 = pneg %p176
      %p183 = scmp.eq.s32.totalorder %s26, 1
      %p184 = por %p182, %p183
      %p185 = scmp.ne.s32.totalorder %s177, %s180
      %p186 = scmp.eq.s32.totalorder %s26, 0
      %p187 = por %p185, %p186
      %p188 = scmp.ne.s32.totalorder %s177, %s180
      %p189 = scmp.eq.s32.totalorder %s31, 1
      %p190 = por %p188, %p189
      %p191 = scmp.ne.s32.totalorder %s180, %s181
      %p192 = scmp.eq.s32.totalorder %s31, 0
      %p193 = por %p191, %p192
      %p194 = scmp.ne.s32.totalorder %s180, %s181
      %p195 = scmp.eq.s32.totalorder %s32, 1
      %p196 = por %p194, %p195
      %p198 = scmp.ne.s32.totalorder %s181, %s197
      %p199 = scmp.eq.s32.totalorder %s32, 0
      %p200 = por %p198, %p199
      %p201 = scmp.le.s32.totalorder 1, %s26
      %p202 = scmp.lt.s32.totalorder %s26, 3
      %p203 = pnand %p201, %p202
      %p204 = pneg %p203
      // Predicated region
      $region9: #{tpu_custom_call.1} parent=5 // pred_check
        _
      $region10: #{tpu_custom_call.1} parent=5 // pred_check_branch
        %206 = sbr.rel (%p203) target = $region12
      $region11: #{tpu_custom_call.1} parent=5 // pred_region
        %s207 = ssub.s32 %s26, 1
        // Predicated region
        $region13: #{tpu_custom_call.1} parent=11 // pred_check
          %p208 = pneg %p99
        $region14: #{tpu_custom_call.1} parent=11 // pred_check_branch
          %210 = sbr.rel (%p208) target = $region16
        $region15: #{tpu_custom_call.1} parent=11 // pred_region
          %212 = vsyncadd [#allocation6], 0
          %s213 = sshll.u32 %s2, 4
          %s214 = int_to_ptr.hbm [resolvable:$true] %s213
          %s215 = sshll.u32 [#allocation7], 4
          %s216 = int_to_ptr.vmem [resolvable:$true] %s215
          %221 = dma.hbm_to_vmem [thread:$0]  %s214, 6144, %s216, [#allocation6], 384, 384, 24
        $region16: #{tpu_custom_call.1} parent=11 // pred_fallthru
          _
        // Predicated region
        $region17: #{tpu_custom_call.1} parent=11 // pred_check
          %p222 = pneg %p120
        $region18: #{tpu_custom_call.1} parent=11 // pred_check_branch
          %224 = sbr.rel (%p222) target = $region20
        $region19: #{tpu_custom_call.1} parent=11 // pred_region
          %226 = vsyncadd [#allocation9], 0
          %s228 = sshll.u32 %s3, 4
          %s229 = int_to_ptr.hbm [resolvable:$true] %s228
          %s230 = sshll.u32 [#allocation8], 4
          %s231 = int_to_ptr.vmem [resolvable:$true] %s230
          %233 = dma.hbm_to_vmem [thread:$0]  %s229, 96, %s231, [#allocation9]
        $region20: #{tpu_custom_call.1} parent=11 // pred_fallthru
          _
        // Predicated region
        $region21: #{tpu_custom_call.1} parent=11 // pred_check
          %p234 = pneg %p141
        $region22: #{tpu_custom_call.1} parent=11 // pred_check_branch
          %236 = sbr.rel (%p234) target = $region24
        $region23: #{tpu_custom_call.1} parent=11 // pred_region
          %238 = vsyncadd [#allocation9], 0
          %s239 = sshll.u32 %s4, 4
          %s240 = int_to_ptr.hbm [resolvable:$true] %s239
          %s241 = sshll.u32 [#allocation10], 4
          %s242 = int_to_ptr.vmem [resolvable:$true] %s241
          %247 = dma.hbm_to_vmem [thread:$0]  %s240, 2048, %s242, [#allocation9], 128, 128, 8
        $region24: #{tpu_custom_call.1} parent=11 // pred_fallthru
          _
      $region12: #{tpu_custom_call.1} parent=5 // pred_fallthru
        _
      %p248 = scmp.lt.s32.totalorder %s26, 2
      // Predicated region
      $region25: #{tpu_custom_call.1} parent=5 // pred_check
        %p249 = pneg %p248
      $region26: #{tpu_custom_call.1} parent=5 // pred_check_branch
        %251 = sbr.rel (%p249) target = $region28
      $region27: #{tpu_custom_call.1} parent=5 // pred_region
        // Predicated region
        $region29: #{tpu_custom_call.1} parent=27 // pred_check
          %p252 = pneg %p46
        $region30: #{tpu_custom_call.1} parent=27 // pred_check_branch
          %254 = sbr.rel (%p252) target = $region32
        $region31: #{tpu_custom_call.1} parent=27 // pred_region
          %s255 = sand.u32 %s36, 1
          %s256 = scalar_lea.sflag [#allocation3], %s255
          %s257 = sand.u32 %s36, 1
          %s258 = smul.addr %s257, 64
          %s259 = scalar_lea.vmem [#allocation2], %s258
          %s260 = smul.u32 8, %s26
          %262 = vsyncadd %s256, 0
          %s263 = smul.addr %s260, 8
          %s264 = scalar_lea.hbm %s0, %s263
          %s265 = sshll.u32 %s264, 4
          %s266 = int_to_ptr.hbm [resolvable:$true] %s265
          %s267 = sshll.u32 %s259, 4
          %s268 = int_to_ptr.vmem [resolvable:$true] %s267
          %273 = dma.hbm_to_vmem [thread:$0]  %s266, 1024, %s268, %s256, 128, 128, 8
        $region32: #{tpu_custom_call.1} parent=27 // pred_fallthru
          _
        // Predicated region
        $region33: #{tpu_custom_call.1} parent=27 // pred_check
          %p274 = pneg %p72
        $region34: #{tpu_custom_call.1} parent=27 // pred_check_branch
          %276 = sbr.rel (%p274) target = $region36
        $region35: #{tpu_custom_call.1} parent=27 // pred_region
          %s277 = sand.u32 %s26, 1
          %s278 = scalar_lea.sflag [#allocation6], %s277
          %s279 = sand.u32 %s62, 1
          %s280 = smul.addr %s279, 64
          %s281 = scalar_lea.vmem [#allocation5], %s280
          %s282 = smul.u32 8, %s26
          %284 = vsyncadd %s278, 0
          %s285 = smul.addr %s282, 8
          %s286 = scalar_lea.hbm %s1, %s285
          %s287 = sshll.u32 %s286, 4
          %s288 = int_to_ptr.hbm [resolvable:$true] %s287
          %s289 = sshll.u32 %s281, 4
          %s290 = int_to_ptr.vmem [resolvable:$true] %s289
          %295 = dma.hbm_to_vmem [thread:$0]  %s288, 1024, %s290, %s278, 128, 128, 8
        $region36: #{tpu_custom_call.1} parent=27 // pred_fallthru
          _
      $region28: #{tpu_custom_call.1} parent=5 // pred_fallthru
        _
      %p296 = scmp.le.s32.totalorder 1, %s26
      %p297 = scmp.lt.s32.totalorder %s26, 3
      %p298 = pnand %p296, %p297
      %p299 = pneg %p298
      // Predicated region
      $region37: #{tpu_custom_call.1} parent=5 // pred_check
        _
      $region38: #{tpu_custom_call.1} parent=5 // pred_check_branch
        %301 = sbr.rel (%p298) target = $region40
      $region39: #{tpu_custom_call.1} parent=5 // pred_region
        %s302 = ssub.s32 %s26, 1
        %s303 = sand.u32 %s39, 1
        %s304 = scalar_lea.sflag [#allocation3], %s303
        %s305 = sand.u32 %s39, 1
        %s306 = smul.addr %s305, 64
        %s307 = scalar_lea.vmem [#allocation2], %s306
        // Predicated region
        $region41: #{tpu_custom_call.1} parent=39 // pred_check
          %p308 = pneg %p52
        $region42: #{tpu_custom_call.1} parent=39 // pred_check_branch
          %310 = sbr.rel (%p308) target = $region44
        $region43: #{tpu_custom_call.1} parent=39 // pred_region
          %312 = dma.done %s304, 1024
        $region44: #{tpu_custom_call.1} parent=39 // pred_fallthru
          _
        %s313 = sand.u32 %s31, 1
        %s314 = scalar_lea.sflag [#allocation6], %s313
        %s315 = sand.u32 %s65, 1
        %s316 = smul.addr %s315, 64
        %s317 = scalar_lea.vmem [#allocation5], %s316
        // Predicated region
        $region45: #{tpu_custom_call.1} parent=39 // pred_check
          %p318 = pneg %p78
        $region46: #{tpu_custom_call.1} parent=39 // pred_check_branch
          %320 = sbr.rel (%p318) target = $region48
        $region47: #{tpu_custom_call.1} parent=39 // pred_region
          %322 = dma.done %s314, 1024
        $region48: #{tpu_custom_call.1} parent=39 // pred_fallthru
          _
        // Predicated region
        $region49: #{tpu_custom_call.1} parent=39 // pred_check
          %p323 = pneg %p99
        $region50: #{tpu_custom_call.1} parent=39 // pred_check_branch
          %325 = sbr.rel (%p323) target = $region52
        $region51: #{tpu_custom_call.1} parent=39 // pred_region
          %327 = dma.done [#allocation6], 6144
        $region52: #{tpu_custom_call.1} parent=39 // pred_fallthru
          _
        // Predicated region
        $region53: #{tpu_custom_call.1} parent=39 // pred_check
          %p328 = pneg %p120
        $region54: #{tpu_custom_call.1} parent=39 // pred_check_branch
          %330 = sbr.rel (%p328) target = $region56
        $region55: #{tpu_custom_call.1} parent=39 // pred_region
          %332 = dma.done [#allocation9], 96
        $region56: #{tpu_custom_call.1} parent=39 // pred_fallthru
          _
        // Predicated region
        $region57: #{tpu_custom_call.1} parent=39 // pred_check
          %p333 = pneg %p141
        $region58: #{tpu_custom_call.1} parent=39 // pred_check_branch
          %335 = sbr.rel (%p333) target = $region60
        $region59: #{tpu_custom_call.1} parent=39 // pred_region
          %337 = dma.done [#allocation9], 2048
        $region60: #{tpu_custom_call.1} parent=39 // pred_fallthru
          _
        %s338 = sand.u32 %s39, 1
        %s339 = scalar_lea.sflag [#allocation3], %s338
        %s340 = sand.u32 %s39, 1
        %s341 = smul.addr %s340, 64
        %s342 = scalar_lea.vmem [#allocation2], %s341
        %p343 = pneg %p52
        %p344 = pneg %p49
        %s345 = sand.u32 %s31, 1
        %s346 = scalar_lea.sflag [#allocation6], %s345
        %s347 = sand.u32 %s65, 1
        %s348 = smul.addr %s347, 64
        %s349 = scalar_lea.vmem [#allocation5], %s348
        %p350 = pneg %p78
        %p351 = pneg %p75
        %p352 = pneg %p99
        %p353 = pneg %p96
        %p354 = pneg %p120
        %p355 = pneg %p117
        %p356 = pneg %p141
        %p357 = pneg %p138
        %p358 = pneg %p167
        %p359 = pneg %p164
        %s360 = sand.u32 %s154, 1
        %s361 = scalar_lea.sflag [#allocation4], %s360
        %s362 = sand.u32 %s154, 1
        %s363 = smul.addr %s362, 128
        %s364 = scalar_lea.vmem [#allocation11], %s363
        %p365 = pneg %p193
        %p366 = pneg %p190
        %s367 = sand.u32 %s180, 1
        %s368 = scalar_lea.sflag [#allocation13], %s367
        %s369 = sand.u32 %s180, 1
        %s370 = smul.addr %s369, 256
        %s371 = scalar_lea.vmem [#allocation12], %s370
        %s372 = smul.u32 8, %s31
        %s373 = smul.u32 8, %s31
        %s374 = smul.u32 8, %s31
        %s375 = smul.u32 8, %s31
        %v376 = vld [vmem:[%s307] sm:$0xff]
        %v377 = vld [vmem:[%s307 + $0x8] sm:$0xff]
        %v378 = vld [vmem:[%s307 + $0x10] sm:$0xff]
        %v379 = vld [vmem:[%s307 + $0x18] sm:$0xff]
        %v380 = vld [vmem:[%s307 + $0x20] sm:$0xff]
        %v381 = vld [vmem:[%s307 + $0x28] sm:$0xff]
        %v382 = vld [vmem:[%s307 + $0x30] sm:$0xff]
        %v383 = vld [vmem:[%s307 + $0x38] sm:$0xff]
        %v384 = vxor.u32 %v376, 2147483648
        %v385 = vxor.u32 %v377, 2147483648
        %v386 = vxor.u32 %v378, 2147483648
        %v387 = vxor.u32 %v379, 2147483648
        %v388 = vxor.u32 %v380, 2147483648
        %v389 = vxor.u32 %v381, 2147483648
        %v390 = vxor.u32 %v382, 2147483648
        %v391 = vxor.u32 %v383, 2147483648
        %v392 = vmul.f32 %v384, 1.442695
        %v393 = vpow.pop %v392
        %v394 = vmul.f32 %v385, 1.442695
        %v395 = vpow.pop %v394
        %v396 = vmul.f32 %v386, 1.442695
        %v397 = vpow.pop %v396
        %v398 = vmul.f32 %v387, 1.442695
        %v399 = vpow.pop %v398
        %v400 = vmul.f32 %v388, 1.442695
        %v401 = vpow.pop %v400
        %v402 = vmul.f32 %v389, 1.442695
        %v403 = vpow.pop %v402
        %v404 = vmul.f32 %v390, 1.442695
        %v405 = vpow.pop %v404
        %v406 = vmul.f32 %v391, 1.442695
        %v407 = vpow.pop %v406
        %v408 = vadd.f32 %v393, 1.0
        %v409 = vadd.f32 %v395, 1.0
        %v410 = vadd.f32 %v397, 1.0
        %v411 = vadd.f32 %v399, 1.0
        %v412 = vadd.f32 %v401, 1.0
        %v413 = vadd.f32 %v403, 1.0
        %v414 = vadd.f32 %v405, 1.0
        %v415 = vadd.f32 %v407, 1.0
        %v416 = vrcp.pop %v408
        %v417 = vmul.f32 %v408, %v416
        %v418 = vsub.f32 1.0, %v417
        %v419 = vmul.f32 %v416, %v418
        %v420 = vadd.f32 %v416, %v419
        %vm421 = vweird.f32 %v408
        %vm422 = vweird.f32 %v416
        %vm423 = vmor %vm421, %vm422
        %v424 = vsel %vm423, %v416, %v420
        %v425 = vand.u32 2147483647, %v408
        %vm426 = vcmp.eq.f32.partialorder %v425, 8.507059e+37
        %v427 = vand.u32 %v408, 2147483648
        %v428 = vor.u32 1.1754944e-38, %v427
        %v429 = vsel %vm426, %v428, %v424
        %v430 = vmul.f32 1.0, %v429
        %v431 = vrcp.pop %v409
        %v432 = vmul.f32 %v409, %v431
        %v433 = vsub.f32 1.0, %v432
        %v434 = vmul.f32 %v431, %v433
        %v435 = vadd.f32 %v431, %v434
        %vm436 = vweird.f32 %v409
        %vm437 = vweird.f32 %v431
        %vm438 = vmor %vm436, %vm437
        %v439 = vsel %vm438, %v431, %v435
        %v440 = vand.u32 2147483647, %v409
        %vm441 = vcmp.eq.f32.partialorder %v440, 8.507059e+37
        %v442 = vand.u32 %v409, 2147483648
        %v443 = vor.u32 1.1754944e-38, %v442
        %v444 = vsel %vm441, %v443, %v439
        %v445 = vmul.f32 1.0, %v444
        %v446 = vrcp.pop %v410
        %v447 = vmul.f32 %v410, %v446
        %v448 = vsub.f32 1.0, %v447
        %v449 = vmul.f32 %v446, %v448
        %v450 = vadd.f32 %v446, %v449
        %vm451 = vweird.f32 %v410
        %vm452 = vweird.f32 %v446
        %vm453 = vmor %vm451, %vm452
        %v454 = vsel %vm453, %v446, %v450
        %v455 = vand.u32 2147483647, %v410
        %vm456 = vcmp.eq.f32.partialorder %v455, 8.507059e+37
        %v457 = vand.u32 %v410, 2147483648
        %v458 = vor.u32 1.1754944e-38, %v457
        %v459 = vsel %vm456, %v458, %v454
        %v460 = vmul.f32 1.0, %v459
        %v461 = vrcp.pop %v411
        %v462 = vmul.f32 %v411, %v461
        %v463 = vsub.f32 1.0, %v462
        %v464 = vmul.f32 %v461, %v463
        %v465 = vadd.f32 %v461, %v464
        %vm466 = vweird.f32 %v411
        %vm467 = vweird.f32 %v461
        %vm468 = vmor %vm466, %vm467
        %v469 = vsel %vm468, %v461, %v465
        %v470 = vand.u32 2147483647, %v411
        %vm471 = vcmp.eq.f32.partialorder %v470, 8.507059e+37
        %v472 = vand.u32 %v411, 2147483648
        %v473 = vor.u32 1.1754944e-38, %v472
        %v474 = vsel %vm471, %v473, %v469
        %v475 = vmul.f32 1.0, %v474
        %v476 = vrcp.pop %v412
        %v477 = vmul.f32 %v412, %v476
        %v478 = vsub.f32 1.0, %v477
        %v479 = vmul.f32 %v476, %v478
        %v480 = vadd.f32 %v476, %v479
        %vm481 = vweird.f32 %v412
        %vm482 = vweird.f32 %v476
        %vm483 = vmor %vm481, %vm482
        %v484 = vsel %vm483, %v476, %v480
        %v485 = vand.u32 2147483647, %v412
        %vm486 = vcmp.eq.f32.partialorder %v485, 8.507059e+37
        %v487 = vand.u32 %v412, 2147483648
        %v488 = vor.u32 1.1754944e-38, %v487
        %v489 = vsel %vm486, %v488, %v484
        %v490 = vmul.f32 1.0, %v489
        %v491 = vrcp.pop %v413
        %v492 = vmul.f32 %v413, %v491
        %v493 = vsub.f32 1.0, %v492
        %v494 = vmul.f32 %v491, %v493
        %v495 = vadd.f32 %v491, %v494
        %vm496 = vweird.f32 %v413
        %vm497 = vweird.f32 %v491
        %vm498 = vmor %vm496, %vm497
        %v499 = vsel %vm498, %v491, %v495
        %v500 = vand.u32 2147483647, %v413
        %vm501 = vcmp.eq.f32.partialorder %v500, 8.507059e+37
        %v502 = vand.u32 %v413, 2147483648
        %v503 = vor.u32 1.1754944e-38, %v502
        %v504 = vsel %vm501, %v503, %v499
        %v505 = vmul.f32 1.0, %v504
        %v506 = vrcp.pop %v414
        %v507 = vmul.f32 %v414, %v506
        %v508 = vsub.f32 1.0, %v507
        %v509 = vmul.f32 %v506, %v508
        %v510 = vadd.f32 %v506, %v509
        %vm511 = vweird.f32 %v414
        %vm512 = vweird.f32 %v506
        %vm513 = vmor %vm511, %vm512
        %v514 = vsel %vm513, %v506, %v510
        %v515 = vand.u32 2147483647, %v414
        %vm516 = vcmp.eq.f32.partialorder %v515, 8.507059e+37
        %v517 = vand.u32 %v414, 2147483648
        %v518 = vor.u32 1.1754944e-38, %v517
        %v519 = vsel %vm516, %v518, %v514
        %v520 = vmul.f32 1.0, %v519
        %v521 = vrcp.pop %v415
        %v522 = vmul.f32 %v415, %v521
        %v523 = vsub.f32 1.0, %v522
        %v524 = vmul.f32 %v521, %v523
        %v525 = vadd.f32 %v521, %v524
        %vm526 = vweird.f32 %v415
        %vm527 = vweird.f32 %v521
        %vm528 = vmor %vm526, %vm527
        %v529 = vsel %vm528, %v521, %v525
        %v530 = vand.u32 2147483647, %v415
        %vm531 = vcmp.eq.f32.partialorder %v530, 8.507059e+37
        %v532 = vand.u32 %v415, 2147483648
        %v533 = vor.u32 1.1754944e-38, %v532
        %v534 = vsel %vm531, %v533, %v529
        %v535 = vmul.f32 1.0, %v534
        %v536 = vmul.f32 %v376, %v430
        %v537 = vmul.f32 %v377, %v445
        %v538 = vmul.f32 %v378, %v460
        %v539 = vmul.f32 %v379, %v475
        %v540 = vmul.f32 %v380, %v490
        %v541 = vmul.f32 %v381, %v505
        %v542 = vmul.f32 %v382, %v520
        %v543 = vmul.f32 %v383, %v535
        %v544 = vpack.c.bf16 %v537, %v536
        %v545 = vpack.c.bf16 %v539, %v538
        %v546 = vpack.c.bf16 %v541, %v540
        %v547 = vpack.c.bf16 %v543, %v542
        %v548 = vld [vmem:[#allocation7] sm:$0xff]
        %v549 = vld [vmem:[#allocation7 + $0x8] sm:$0xff]
        %v550 = vld [vmem:[#allocation7 + $0x10] sm:$0xff]
        %v551 = vld [vmem:[#allocation7 + $0x18] sm:$0xff]
        %v552 = vld [vmem:[#allocation7 + $0x20] sm:$0xff]
        %v553 = vld [vmem:[#allocation7 + $0x28] sm:$0xff]
        %v554 = vld [vmem:[#allocation7 + $0x30] sm:$0xff]
        %v555 = vld [vmem:[#allocation7 + $0x38] sm:$0xff]
        %v556 = vld [vmem:[#allocation7 + $0x40] sm:$0xff]
        %v557 = vld [vmem:[#allocation7 + $0x48] sm:$0xff]
        %v558 = vld [vmem:[#allocation7 + $0x50] sm:$0xff]
        %v559 = vld [vmem:[#allocation7 + $0x58] sm:$0xff]
        %v560 = vld [vmem:[#allocation7 + $0x60] sm:$0xff]
        %v561 = vld [vmem:[#allocation7 + $0x68] sm:$0xff]
        %v562 = vld [vmem:[#allocation7 + $0x70] sm:$0xff]
        %v563 = vld [vmem:[#allocation7 + $0x78] sm:$0xff]
        %v564 = vld [vmem:[#allocation7 + $0x80] sm:$0xff]
        %v565 = vld [vmem:[#allocation7 + $0x88] sm:$0xff]
        %v566 = vld [vmem:[#allocation7 + $0x90] sm:$0xff]
        %v567 = vld [vmem:[#allocation7 + $0x98] sm:$0xff]
        %v568 = vld [vmem:[#allocation7 + $0xa0] sm:$0xff]
        %v569 = vld [vmem:[#allocation7 + $0xa8] sm:$0xff]
        %v570 = vld [vmem:[#allocation7 + $0xb0] sm:$0xff]
        %v571 = vld [vmem:[#allocation7 + $0xb8] sm:$0xff]
        %v572 = vld [vmem:[#allocation7 + $0xc0] sm:$0xff]
        %v573 = vld [vmem:[#allocation7 + $0xc8] sm:$0xff]
        %v574 = vld [vmem:[#allocation7 + $0xd0] sm:$0xff]
        %v575 = vld [vmem:[#allocation7 + $0xd8] sm:$0xff]
        %v576 = vld [vmem:[#allocation7 + $0xe0] sm:$0xff]
        %v577 = vld [vmem:[#allocation7 + $0xe8] sm:$0xff]
        %v578 = vld [vmem:[#allocation7 + $0xf0] sm:$0xff]
        %v579 = vld [vmem:[#allocation7 + $0xf8] sm:$0xff]
        %v580 = vld [vmem:[#allocation7 + $0x100] sm:$0xff]
        %v581 = vld [vmem:[#allocation7 + $0x108] sm:$0xff]
        %v582 = vld [vmem:[#allocation7 + $0x110] sm:$0xff]
        %v583 = vld [vmem:[#allocation7 + $0x118] sm:$0xff]
        %v584 = vld [vmem:[#allocation7 + $0x120] sm:$0xff]
        %v585 = vld [vmem:[#allocation7 + $0x128] sm:$0xff]
        %v586 = vld [vmem:[#allocation7 + $0x130] sm:$0xff]
        %v587 = vld [vmem:[#allocation7 + $0x138] sm:$0xff]
        %v588 = vld [vmem:[#allocation7 + $0x140] sm:$0xff]
        %v589 = vld [vmem:[#allocation7 + $0x148] sm:$0xff]
        %v590 = vld [vmem:[#allocation7 + $0x150] sm:$0xff]
        %v591 = vld [vmem:[#allocation7 + $0x158] sm:$0xff]
        %v592 = vld [vmem:[#allocation7 + $0x160] sm:$0xff]
        %v593 = vld [vmem:[#allocation7 + $0x168] sm:$0xff]
        %v594 = vld [vmem:[#allocation7 + $0x170] sm:$0xff]
        %v595 = vld [vmem:[#allocation7 + $0x178] sm:$0xff]
        %v596 = vld [vmem:[#allocation8] sm:$0x3f]
        %v598 = vperm.slane %v596, 0
        %v599 = vperm.slane %v596, 1
        %v600 = vperm.slane %v596, 2
        %v601 = vperm.slane %v596, 3
        %v602 = vperm.slane %v596, 4
        %v603 = vperm.slane %v596, 5
        %v658 = vunpack.c.l.b16 %v548
        %v659 = vunpack.c.h.b16 %v548
        %v660 = vunpack.c.l.b16 %v549
        %v661 = vunpack.c.h.b16 %v549
        %v662 = vunpack.c.l.b16 %v550
        %v663 = vunpack.c.h.b16 %v550
        %v664 = vunpack.c.l.b16 %v551
        %v665 = vunpack.c.h.b16 %v551
        %v666 = vunpack.c.l.b16 %v552
        %v667 = vunpack.c.h.b16 %v552
        %v668 = vunpack.c.l.b16 %v553
        %v669 = vunpack.c.h.b16 %v553
        %v670 = vunpack.c.l.b16 %v554
        %v671 = vunpack.c.h.b16 %v554
        %v672 = vunpack.c.l.b16 %v555
        %v673 = vunpack.c.h.b16 %v555
        %v674 = vunpack.c.l.b16 %v556
        %v675 = vunpack.c.h.b16 %v556
        %v676 = vunpack.c.l.b16 %v557
        %v677 = vunpack.c.h.b16 %v557
        %v678 = vunpack.c.l.b16 %v558
        %v679 = vunpack.c.h.b16 %v558
        %v680 = vunpack.c.l.b16 %v559
        %v681 = vunpack.c.h.b16 %v559
        %v682 = vunpack.c.l.b16 %v560
        %v683 = vunpack.c.h.b16 %v560
        %v684 = vunpack.c.l.b16 %v561
        %v685 = vunpack.c.h.b16 %v561
        %v686 = vunpack.c.l.b16 %v562
        %v687 = vunpack.c.h.b16 %v562
        %v688 = vunpack.c.l.b16 %v563
        %v689 = vunpack.c.h.b16 %v563
        %v690 = vunpack.c.l.b16 %v564
        %v691 = vunpack.c.h.b16 %v564
        %v692 = vunpack.c.l.b16 %v565
        %v693 = vunpack.c.h.b16 %v565
        %v694 = vunpack.c.l.b16 %v566
        %v695 = vunpack.c.h.b16 %v566
        %v696 = vunpack.c.l.b16 %v567
        %v697 = vunpack.c.h.b16 %v567
        %v698 = vunpack.c.l.b16 %v568
        %v699 = vunpack.c.h.b16 %v568
        %v700 = vunpack.c.l.b16 %v569
        %v701 = vunpack.c.h.b16 %v569
        %v702 = vunpack.c.l.b16 %v570
        %v703 = vunpack.c.h.b16 %v570
        %v704 = vunpack.c.l.b16 %v571
        %v705 = vunpack.c.h.b16 %v571
        %v706 = vunpack.c.l.b16 %v572
        %v707 = vunpack.c.h.b16 %v572
        %v708 = vunpack.c.l.b16 %v573
        %v709 = vunpack.c.h.b16 %v573
        %v710 = vunpack.c.l.b16 %v574
        %v711 = vunpack.c.h.b16 %v574
        %v712 = vunpack.c.l.b16 %v575
        %v713 = vunpack.c.h.b16 %v575
        %v714 = vunpack.c.l.b16 %v576
        %v715 = vunpack.c.h.b16 %v576
        %v716 = vunpack.c.l.b16 %v577
        %v717 = vunpack.c.h.b16 %v577
        %v718 = vunpack.c.l.b16 %v578
        %v719 = vunpack.c.h.b16 %v578
        %v720 = vunpack.c.l.b16 %v579
        %v721 = vunpack.c.h.b16 %v579
        %v722 = vunpack.c.l.b16 %v580
        %v723 = vunpack.c.h.b16 %v580
        %v724 = vunpack.c.l.b16 %v581
        %v725 = vunpack.c.h.b16 %v581
        %v726 = vunpack.c.l.b16 %v582
        %v727 = vunpack.c.h.b16 %v582
        %v728 = vunpack.c.l.b16 %v583
        %v729 = vunpack.c.h.b16 %v583
        %v730 = vunpack.c.l.b16 %v584
        %v731 = vunpack.c.h.b16 %v584
        %v732 = vunpack.c.l.b16 %v585
        %v733 = vunpack.c.h.b16 %v585
        %v734 = vunpack.c.l.b16 %v586
        %v735 = vunpack.c.h.b16 %v586
        %v736 = vunpack.c.l.b16 %v587
        %v737 = vunpack.c.h.b16 %v587
        %v738 = vunpack.c.l.b16 %v588
        %v739 = vunpack.c.h.b16 %v588
        %v740 = vunpack.c.l.b16 %v589
        %v741 = vunpack.c.h.b16 %v589
        %v742 = vunpack.c.l.b16 %v590
        %v743 = vunpack.c.h.b16 %v590
        %v744 = vunpack.c.l.b16 %v591
        %v745 = vunpack.c.h.b16 %v591
        %v746 = vunpack.c.l.b16 %v592
        %v747 = vunpack.c.h.b16 %v592
        %v748 = vunpack.c.l.b16 %v593
        %v749 = vunpack.c.h.b16 %v593
        %v750 = vunpack.c.l.b16 %v594
        %v751 = vunpack.c.h.b16 %v594
        %v752 = vunpack.c.l.b16 %v595
        %v753 = vunpack.c.h.b16 %v595
        %v754 = vpack.c.b16 %v664, %v658
        %v755 = vpack.c.b16 %v665, %v659
        %v756 = vpack.c.b16 %v666, %v660
        %v757 = vpack.c.b16 %v667, %v661
        %v758 = vpack.c.b16 %v668, %v662
        %v759 = vpack.c.b16 %v669, %v663
        %v760 = vpack.c.b16 %v676, %v670
        %v761 = vpack.c.b16 %v677, %v671
        %v762 = vpack.c.b16 %v678, %v672
        %v763 = vpack.c.b16 %v679, %v673
        %v764 = vpack.c.b16 %v680, %v674
        %v765 = vpack.c.b16 %v681, %v675
        %v766 = vpack.c.b16 %v688, %v682
        %v767 = vpack.c.b16 %v689, %v683
        %v768 = vpack.c.b16 %v690, %v684
        %v769 = vpack.c.b16 %v691, %v685
        %v770 = vpack.c.b16 %v692, %v686
        %v771 = vpack.c.b16 %v693, %v687
        %v772 = vpack.c.b16 %v700, %v694
        %v773 = vpack.c.b16 %v701, %v695
        %v774 = vpack.c.b16 %v702, %v696
        %v775 = vpack.c.b16 %v703, %v697
        %v776 = vpack.c.b16 %v704, %v698
        %v777 = vpack.c.b16 %v705, %v699
        %v778 = vpack.c.b16 %v712, %v706
        %v779 = vpack.c.b16 %v713, %v707
        %v780 = vpack.c.b16 %v714, %v708
        %v781 = vpack.c.b16 %v715, %v709
        %v782 = vpack.c.b16 %v716, %v710
        %v783 = vpack.c.b16 %v717, %v711
        %v784 = vpack.c.b16 %v724, %v718
        %v785 = vpack.c.b16 %v725, %v719
        %v786 = vpack.c.b16 %v726, %v720
        %v787 = vpack.c.b16 %v727, %v721
        %v788 = vpack.c.b16 %v728, %v722
        %v789 = vpack.c.b16 %v729, %v723
        %v790 = vpack.c.b16 %v736, %v730
        %v791 = vpack.c.b16 %v737, %v731
        %v792 = vpack.c.b16 %v738, %v732
        %v793 = vpack.c.b16 %v739, %v733
        %v794 = vpack.c.b16 %v740, %v734
        %v795 = vpack.c.b16 %v741, %v735
        %v796 = vpack.c.b16 %v748, %v742
        %v797 = vpack.c.b16 %v749, %v743
        %v798 = vpack.c.b16 %v750, %v744
        %v799 = vpack.c.b16 %v751, %v745
        %v800 = vpack.c.b16 %v752, %v746
        %v801 = vpack.c.b16 %v753, %v747
        %850 = vmatpush.bf16.msra.mxu0 %v796
        %851 = vmatpush.bf16.msra.mxu0 %v790
        %852 = vmatpush.bf16.msra.mxu0 %v784
        %853 = vmatpush.bf16.msra.mxu0 %v778
        %854 = vmatpush.bf16.msra.mxu0 %v772
        %855 = vmatpush.bf16.msra.mxu0 %v766
        %856 = vmatpush.bf16.msra.mxu0 %v760
        %857 = vmatpush.bf16.msra.mxu0 %v754
        %858 = vmatmul.bf16.gmra.mxu0 %v544
        %v859 = vpop.f32.mrf.mxu0
        %v860 = vadd.f32 %v598, %v859
        %v861 = vpop.f32.mrf.mxu0
        %v862 = vadd.f32 %v598, %v861
        %863 = vmatmul.bf16.gmra.mxu0 %v545
        %v864 = vpop.f32.mrf.mxu0
        %v865 = vadd.f32 %v598, %v864
        %v866 = vpop.f32.mrf.mxu0
        %v867 = vadd.f32 %v598, %v866
        %868 = vmatmul.bf16.gmra.mxu0 %v546
        %v869 = vpop.f32.mrf.mxu0
        %v870 = vadd.f32 %v598, %v869
        %v871 = vpop.f32.mrf.mxu0
        %v872 = vadd.f32 %v598, %v871
        %873 = vmatmul.bf16.gmra.mxu0 %v547
        %v874 = vpop.f32.mrf.mxu0
        %v875 = vadd.f32 %v598, %v874
        %v876 = vpop.f32.mrf.mxu0
        %v877 = vadd.f32 %v598, %v876
        %878 = vdwg.mxu0
        %879 = vmatpush.bf16.msra.mxu0 %v797
        %880 = vmatpush.bf16.msra.mxu0 %v791
        %881 = vmatpush.bf16.msra.mxu0 %v785
        %882 = vmatpush.bf16.msra.mxu0 %v779
        %883 = vmatpush.bf16.msra.mxu0 %v773
        %884 = vmatpush.bf16.msra.mxu0 %v767
        %885 = vmatpush.bf16.msra.mxu0 %v761
        %886 = vmatpush.bf16.msra.mxu0 %v755
        %887 = vmatmul.bf16.gmra.mxu0 %v544
        %v888 = vpop.f32.mrf.mxu0
        %v889 = vadd.f32 %v599, %v888
        %v890 = vpop.f32.mrf.mxu0
        %v891 = vadd.f32 %v599, %v890
        %892 = vmatmul.bf16.gmra.mxu0 %v545
        %v893 = vpop.f32.mrf.mxu0
        %v894 = vadd.f32 %v599, %v893
        %v895 = vpop.f32.mrf.mxu0
        %v896 = vadd.f32 %v599, %v895
        %897 = vmatmul.bf16.gmra.mxu0 %v546
        %v898 = vpop.f32.mrf.mxu0
        %v899 = vadd.f32 %v599, %v898
        %v900 = vpop.f32.mrf.mxu0
        %v901 = vadd.f32 %v599, %v900
        %902 = vmatmul.bf16.gmra.mxu0 %v547
        %v903 = vpop.f32.mrf.mxu0
        %v904 = vadd.f32 %v599, %v903
        %v905 = vpop.f32.mrf.mxu0
        %v906 = vadd.f32 %v599, %v905
        %907 = vdwg.mxu0
        %908 = vmatpush.bf16.msra.mxu0 %v798
        %909 = vmatpush.bf16.msra.mxu0 %v792
        %910 = vmatpush.bf16.msra.mxu0 %v786
        %911 = vmatpush.bf16.msra.mxu0 %v780
        %912 = vmatpush.bf16.msra.mxu0 %v774
        %913 = vmatpush.bf16.msra.mxu0 %v768
        %914 = vmatpush.bf16.msra.mxu0 %v762
        %915 = vmatpush.bf16.msra.mxu0 %v756
        %916 = vmatmul.bf16.gmra.mxu0 %v544
        %v917 = vpop.f32.mrf.mxu0
        %v918 = vadd.f32 %v600, %v917
        %v919 = vpop.f32.mrf.mxu0
        %v920 = vadd.f32 %v600, %v919
        %921 = vmatmul.bf16.gmra.mxu0 %v545
        %v922 = vpop.f32.mrf.mxu0
        %v923 = vadd.f32 %v600, %v922
        %v924 = vpop.f32.mrf.mxu0
        %v925 = vadd.f32 %v600, %v924
        %926 = vmatmul.bf16.gmra.mxu0 %v546
        %v927 = vpop.f32.mrf.mxu0
        %v928 = vadd.f32 %v600, %v927
        %v929 = vpop.f32.mrf.mxu0
        %v930 = vadd.f32 %v600, %v929
        %931 = vmatmul.bf16.gmra.mxu0 %v547
        %v932 = vpop.f32.mrf.mxu0
        %v933 = vadd.f32 %v600, %v932
        %v934 = vpop.f32.mrf.mxu0
        %v935 = vadd.f32 %v600, %v934
        %936 = vdwg.mxu0
        %937 = vmatpush.bf16.msra.mxu0 %v799
        %938 = vmatpush.bf16.msra.mxu0 %v793
        %939 = vmatpush.bf16.msra.mxu0 %v787
        %940 = vmatpush.bf16.msra.mxu0 %v781
        %941 = vmatpush.bf16.msra.mxu0 %v775
        %942 = vmatpush.bf16.msra.mxu0 %v769
        %943 = vmatpush.bf16.msra.mxu0 %v763
        %944 = vmatpush.bf16.msra.mxu0 %v757
        %945 = vmatmul.bf16.gmra.mxu0 %v544
        %v946 = vpop.f32.mrf.mxu0
        %v947 = vadd.f32 %v601, %v946
        %v948 = vpop.f32.mrf.mxu0
        %v949 = vadd.f32 %v601, %v948
        %950 = vmatmul.bf16.gmra.mxu0 %v545
        %v951 = vpop.f32.mrf.mxu0
        %v952 = vadd.f32 %v601, %v951
        %v953 = vpop.f32.mrf.mxu0
        %v954 = vadd.f32 %v601, %v953
        %955 = vmatmul.bf16.gmra.mxu0 %v546
        %v956 = vpop.f32.mrf.mxu0
        %v957 = vadd.f32 %v601, %v956
        %v958 = vpop.f32.mrf.mxu0
        %v959 = vadd.f32 %v601, %v958
        %960 = vmatmul.bf16.gmra.mxu0 %v547
        %v961 = vpop.f32.mrf.mxu0
        %v962 = vadd.f32 %v601, %v961
        %v963 = vpop.f32.mrf.mxu0
        %v964 = vadd.f32 %v601, %v963
        %965 = vdwg.mxu0
        %966 = vmatpush.bf16.msra.mxu0 %v800
        %967 = vmatpush.bf16.msra.mxu0 %v794
        %968 = vmatpush.bf16.msra.mxu0 %v788
        %969 = vmatpush.bf16.msra.mxu0 %v782
        %970 = vmatpush.bf16.msra.mxu0 %v776
        %971 = vmatpush.bf16.msra.mxu0 %v770
        %972 = vmatpush.bf16.msra.mxu0 %v764
        %973 = vmatpush.bf16.msra.mxu0 %v758
        %974 = vmatmul.bf16.gmra.mxu0 %v544
        %v975 = vpop.f32.mrf.mxu0
        %v976 = vadd.f32 %v602, %v975
        %v977 = vpop.f32.mrf.mxu0
        %v978 = vadd.f32 %v602, %v977
        %979 = vmatmul.bf16.gmra.mxu0 %v545
        %v980 = vpop.f32.mrf.mxu0
        %v981 = vadd.f32 %v602, %v980
        %v982 = vpop.f32.mrf.mxu0
        %v983 = vadd.f32 %v602, %v982
        %984 = vmatmul.bf16.gmra.mxu0 %v546
        %v985 = vpop.f32.mrf.mxu0
        %v986 = vadd.f32 %v602, %v985
        %v987 = vpop.f32.mrf.mxu0
        %v988 = vadd.f32 %v602, %v987
        %989 = vmatmul.bf16.gmra.mxu0 %v547
        %v990 = vpop.f32.mrf.mxu0
        %v991 = vadd.f32 %v602, %v990
        %v992 = vpop.f32.mrf.mxu0
        %v993 = vadd.f32 %v602, %v992
        %994 = vdwg.mxu0
        %995 = vmatpush.bf16.msra.mxu0 %v801
        %996 = vmatpush.bf16.msra.mxu0 %v795
        %997 = vmatpush.bf16.msra.mxu0 %v789
        %998 = vmatpush.bf16.msra.mxu0 %v783
        %999 = vmatpush.bf16.msra.mxu0 %v777
        %1000 = vmatpush.bf16.msra.mxu0 %v771
        %1001 = vmatpush.bf16.msra.mxu0 %v765
        %1002 = vmatpush.bf16.msra.mxu0 %v759
        %1003 = vmatmul.bf16.gmra.mxu0 %v544
        %v1004 = vpop.f32.mrf.mxu0
        %v1005 = vadd.f32 %v603, %v1004
        %v1006 = vpop.f32.mrf.mxu0
        %v1007 = vadd.f32 %v603, %v1006
        %1008 = vmatmul.bf16.gmra.mxu0 %v545
        %v1009 = vpop.f32.mrf.mxu0
        %v1010 = vadd.f32 %v603, %v1009
        %v1011 = vpop.f32.mrf.mxu0
        %v1012 = vadd.f32 %v603, %v1011
        %1013 = vmatmul.bf16.gmra.mxu0 %v546
        %v1014 = vpop.f32.mrf.mxu0
        %v1015 = vadd.f32 %v603, %v1014
        %v1016 = vpop.f32.mrf.mxu0
        %v1017 = vadd.f32 %v603, %v1016
        %1018 = vmatmul.bf16.gmra.mxu0 %v547
        %v1019 = vpop.f32.mrf.mxu0
        %v1020 = vadd.f32 %v603, %v1019
        %v1021 = vpop.f32.mrf.mxu0
        %v1022 = vadd.f32 %v603, %v1021
        %1023 = vdwg.mxu0
        %1024 = vst [vmem:[%s371] sm:$0xff] %v918
        %1025 = vst [vmem:[%s371 + $0x8] sm:$0xff] %v947
        %1026 = vst [vmem:[%s371 + $0x10] sm:$0xff] %v976
        %1027 = vst [vmem:[%s371 + $0x18] sm:$0xff] %v1005
        %1028 = vst [vmem:[%s371 + $0x20] sm:$0xff] %v920
        %1029 = vst [vmem:[%s371 + $0x28] sm:$0xff] %v949
        %1030 = vst [vmem:[%s371 + $0x30] sm:$0xff] %v978
        %1031 = vst [vmem:[%s371 + $0x38] sm:$0xff] %v1007
        %1032 = vst [vmem:[%s371 + $0x40] sm:$0xff] %v923
        %1033 = vst [vmem:[%s371 + $0x48] sm:$0xff] %v952
        %1034 = vst [vmem:[%s371 + $0x50] sm:$0xff] %v981
        %1035 = vst [vmem:[%s371 + $0x58] sm:$0xff] %v1010
        %1036 = vst [vmem:[%s371 + $0x60] sm:$0xff] %v925
        %1037 = vst [vmem:[%s371 + $0x68] sm:$0xff] %v954
        %1038 = vst [vmem:[%s371 + $0x70] sm:$0xff] %v983
        %1039 = vst [vmem:[%s371 + $0x78] sm:$0xff] %v1012
        %1040 = vst [vmem:[%s371 + $0x80] sm:$0xff] %v928
        %1041 = vst [vmem:[%s371 + $0x88] sm:$0xff] %v957
        %1042 = vst [vmem:[%s371 + $0x90] sm:$0xff] %v986
        %1043 = vst [vmem:[%s371 + $0x98] sm:$0xff] %v1015
        %1044 = vst [vmem:[%s371 + $0xa0] sm:$0xff] %v930
        %1045 = vst [vmem:[%s371 + $0xa8] sm:$0xff] %v959
        %1046 = vst [vmem:[%s371 + $0xb0] sm:$0xff] %v988
        %1047 = vst [vmem:[%s371 + $0xb8] sm:$0xff] %v1017
        %1048 = vst [vmem:[%s371 + $0xc0] sm:$0xff] %v933
        %1049 = vst [vmem:[%s371 + $0xc8] sm:$0xff] %v962
        %1050 = vst [vmem:[%s371 + $0xd0] sm:$0xff] %v991
        %1051 = vst [vmem:[%s371 + $0xd8] sm:$0xff] %v1020
        %1052 = vst [vmem:[%s371 + $0xe0] sm:$0xff] %v935
        %1053 = vst [vmem:[%s371 + $0xe8] sm:$0xff] %v964
        %1054 = vst [vmem:[%s371 + $0xf0] sm:$0xff] %v993
        %1055 = vst [vmem:[%s371 + $0xf8] sm:$0xff] %v1022
        %v1056 = vld [vmem:[%s317] sm:$0xff]
        %v1057 = vld [vmem:[%s317 + $0x8] sm:$0xff]
        %v1058 = vld [vmem:[%s317 + $0x10] sm:$0xff]
        %v1059 = vld [vmem:[%s317 + $0x18] sm:$0xff]
        %v1060 = vld [vmem:[%s317 + $0x20] sm:$0xff]
        %v1061 = vld [vmem:[%s317 + $0x28] sm:$0xff]
        %v1062 = vld [vmem:[%s317 + $0x30] sm:$0xff]
        %v1063 = vld [vmem:[%s317 + $0x38] sm:$0xff]
        %v1064 = vadd.f32 %v889, 1.0
        %v1065 = vadd.f32 %v891, 1.0
        %v1066 = vadd.f32 %v894, 1.0
        %v1067 = vadd.f32 %v896, 1.0
        %v1068 = vadd.f32 %v899, 1.0
        %v1069 = vadd.f32 %v901, 1.0
        %v1070 = vadd.f32 %v904, 1.0
        %v1071 = vadd.f32 %v906, 1.0
        %v1072 = vmul.f32 %v1056, %v1064
        %v1073 = vmul.f32 %v1057, %v1065
        %v1074 = vmul.f32 %v1058, %v1066
        %v1075 = vmul.f32 %v1059, %v1067
        %v1076 = vmul.f32 %v1060, %v1068
        %v1077 = vmul.f32 %v1061, %v1069
        %v1078 = vmul.f32 %v1062, %v1070
        %v1079 = vmul.f32 %v1063, %v1071
        %v1080 = vadd.f32 %v1072, %v860
        %v1081 = vadd.f32 %v1073, %v862
        %v1082 = vadd.f32 %v1074, %v865
        %v1083 = vadd.f32 %v1075, %v867
        %v1084 = vadd.f32 %v1076, %v870
        %v1085 = vadd.f32 %v1077, %v872
        %v1086 = vadd.f32 %v1078, %v875
        %v1087 = vadd.f32 %v1079, %v877
        %v1088 = vpack.c.bf16 %v1081, %v1080
        %v1089 = vpack.c.bf16 %v1083, %v1082
        %v1090 = vpack.c.bf16 %v1085, %v1084
        %v1091 = vpack.c.bf16 %v1087, %v1086
        %v1092 = vld [vmem:[#allocation10] sm:$0xff]
        %v1093 = vld [vmem:[#allocation10 + $0x8] sm:$0xff]
        %v1094 = vld [vmem:[#allocation10 + $0x10] sm:$0xff]
        %v1095 = vld [vmem:[#allocation10 + $0x18] sm:$0xff]
        %v1096 = vld [vmem:[#allocation10 + $0x20] sm:$0xff]
        %v1097 = vld [vmem:[#allocation10 + $0x28] sm:$0xff]
        %v1098 = vld [vmem:[#allocation10 + $0x30] sm:$0xff]
        %v1099 = vld [vmem:[#allocation10 + $0x38] sm:$0xff]
        %v1100 = vld [vmem:[#allocation10 + $0x40] sm:$0xff]
        %v1101 = vld [vmem:[#allocation10 + $0x48] sm:$0xff]
        %v1102 = vld [vmem:[#allocation10 + $0x50] sm:$0xff]
        %v1103 = vld [vmem:[#allocation10 + $0x58] sm:$0xff]
        %v1104 = vld [vmem:[#allocation10 + $0x60] sm:$0xff]
        %v1105 = vld [vmem:[#allocation10 + $0x68] sm:$0xff]
        %v1106 = vld [vmem:[#allocation10 + $0x70] sm:$0xff]
        %v1107 = vld [vmem:[#allocation10 + $0x78] sm:$0xff]
        %v1124 = vunpack.c.l.b16 %v1092
        %v1125 = vunpack.c.h.b16 %v1092
        %v1126 = vunpack.c.l.b16 %v1093
        %v1127 = vunpack.c.h.b16 %v1093
        %v1128 = vunpack.c.l.b16 %v1094
        %v1129 = vunpack.c.h.b16 %v1094
        %v1130 = vunpack.c.l.b16 %v1095
        %v1131 = vunpack.c.h.b16 %v1095
        %v1132 = vunpack.c.l.b16 %v1096
        %v1133 = vunpack.c.h.b16 %v1096
        %v1134 = vunpack.c.l.b16 %v1097
        %v1135 = vunpack.c.h.b16 %v1097
        %v1136 = vunpack.c.l.b16 %v1098
        %v1137 = vunpack.c.h.b16 %v1098
        %v1138 = vunpack.c.l.b16 %v1099
        %v1139 = vunpack.c.h.b16 %v1099
        %v1140 = vunpack.c.l.b16 %v1100
        %v1141 = vunpack.c.h.b16 %v1100
        %v1142 = vunpack.c.l.b16 %v1101
        %v1143 = vunpack.c.h.b16 %v1101
        %v1144 = vunpack.c.l.b16 %v1102
        %v1145 = vunpack.c.h.b16 %v1102
        %v1146 = vunpack.c.l.b16 %v1103
        %v1147 = vunpack.c.h.b16 %v1103
        %v1148 = vunpack.c.l.b16 %v1104
        %v1149 = vunpack.c.h.b16 %v1104
        %v1150 = vunpack.c.l.b16 %v1105
        %v1151 = vunpack.c.h.b16 %v1105
        %v1152 = vunpack.c.l.b16 %v1106
        %v1153 = vunpack.c.h.b16 %v1106
        %v1154 = vunpack.c.l.b16 %v1107
        %v1155 = vunpack.c.h.b16 %v1107
        %v1156 = vpack.c.b16 %v1126, %v1124
        %v1157 = vpack.c.b16 %v1127, %v1125
        %v1158 = vpack.c.b16 %v1130, %v1128
        %v1159 = vpack.c.b16 %v1131, %v1129
        %v1160 = vpack.c.b16 %v1134, %v1132
        %v1161 = vpack.c.b16 %v1135, %v1133
        %v1162 = vpack.c.b16 %v1138, %v1136
        %v1163 = vpack.c.b16 %v1139, %v1137
        %v1164 = vpack.c.b16 %v1142, %v1140
        %v1165 = vpack.c.b16 %v1143, %v1141
        %v1166 = vpack.c.b16 %v1146, %v1144
        %v1167 = vpack.c.b16 %v1147, %v1145
        %v1168 = vpack.c.b16 %v1150, %v1148
        %v1169 = vpack.c.b16 %v1151, %v1149
        %v1170 = vpack.c.b16 %v1154, %v1152
        %v1171 = vpack.c.b16 %v1155, %v1153
        %1188 = vmatpush.bf16.msra.mxu0 %v1170
        %1189 = vmatpush.bf16.msra.mxu0 %v1168
        %1190 = vmatpush.bf16.msra.mxu0 %v1166
        %1191 = vmatpush.bf16.msra.mxu0 %v1164
        %1192 = vmatpush.bf16.msra.mxu0 %v1162
        %1193 = vmatpush.bf16.msra.mxu0 %v1160
        %1194 = vmatpush.bf16.msra.mxu0 %v1158
        %1195 = vmatpush.bf16.msra.mxu0 %v1156
        %1196 = vmatmul.bf16.gmra.mxu0 %v1088
        %v1197 = vpop.f32.mrf.mxu0
        %v1198 = vadd.f32 0.0, %v1197
        %v1199 = vpop.f32.mrf.mxu0
        %v1200 = vadd.f32 0.0, %v1199
        %1201 = vmatmul.bf16.gmra.mxu0 %v1089
        %v1202 = vpop.f32.mrf.mxu0
        %v1203 = vadd.f32 0.0, %v1202
        %v1204 = vpop.f32.mrf.mxu0
        %v1205 = vadd.f32 0.0, %v1204
        %1206 = vmatmul.bf16.gmra.mxu0 %v1090
        %v1207 = vpop.f32.mrf.mxu0
        %v1208 = vadd.f32 0.0, %v1207
        %v1209 = vpop.f32.mrf.mxu0
        %v1210 = vadd.f32 0.0, %v1209
        %1211 = vmatmul.bf16.gmra.mxu0 %v1091
        %v1212 = vpop.f32.mrf.mxu0
        %v1213 = vadd.f32 0.0, %v1212
        %v1214 = vpop.f32.mrf.mxu0
        %v1215 = vadd.f32 0.0, %v1214
        %1216 = vdwg.mxu0
        %1217 = vmatpush.bf16.msra.mxu0 %v1171
        %1218 = vmatpush.bf16.msra.mxu0 %v1169
        %1219 = vmatpush.bf16.msra.mxu0 %v1167
        %1220 = vmatpush.bf16.msra.mxu0 %v1165
        %1221 = vmatpush.bf16.msra.mxu0 %v1163
        %1222 = vmatpush.bf16.msra.mxu0 %v1161
        %1223 = vmatpush.bf16.msra.mxu0 %v1159
        %1224 = vmatpush.bf16.msra.mxu0 %v1157
        %1225 = vmatmul.bf16.gmra.mxu0 %v1088
        %v1226 = vpop.f32.mrf.mxu0
        %v1227 = vadd.f32 0.0, %v1226
        %v1228 = vpop.f32.mrf.mxu0
        %v1229 = vadd.f32 0.0, %v1228
        %1230 = vmatmul.bf16.gmra.mxu0 %v1089
        %v1231 = vpop.f32.mrf.mxu0
        %v1232 = vadd.f32 0.0, %v1231
        %v1233 = vpop.f32.mrf.mxu0
        %v1234 = vadd.f32 0.0, %v1233
        %1235 = vmatmul.bf16.gmra.mxu0 %v1090
        %v1236 = vpop.f32.mrf.mxu0
        %v1237 = vadd.f32 0.0, %v1236
        %v1238 = vpop.f32.mrf.mxu0
        %v1239 = vadd.f32 0.0, %v1238
        %1240 = vmatmul.bf16.gmra.mxu0 %v1091
        %v1241 = vpop.f32.mrf.mxu0
        %v1242 = vadd.f32 0.0, %v1241
        %v1243 = vpop.f32.mrf.mxu0
        %v1244 = vadd.f32 0.0, %v1243
        %1245 = vdwg.mxu0
        %1246 = vst [vmem:[%s364] sm:$0xff] %v1198
        %1247 = vst [vmem:[%s364 + $0x8] sm:$0xff] %v1227
        %1248 = vst [vmem:[%s364 + $0x10] sm:$0xff] %v1200
        %1249 = vst [vmem:[%s364 + $0x18] sm:$0xff] %v1229
        %1250 = vst [vmem:[%s364 + $0x20] sm:$0xff] %v1203
        %1251 = vst [vmem:[%s364 + $0x28] sm:$0xff] %v1232
        %1252 = vst [vmem:[%s364 + $0x30] sm:$0xff] %v1205
        %1253 = vst [vmem:[%s364 + $0x38] sm:$0xff] %v1234
        %1254 = vst [vmem:[%s364 + $0x40] sm:$0xff] %v1208
        %1255 = vst [vmem:[%s364 + $0x48] sm:$0xff] %v1237
        %1256 = vst [vmem:[%s364 + $0x50] sm:$0xff] %v1210
        %1257 = vst [vmem:[%s364 + $0x58] sm:$0xff] %v1239
        %1258 = vst [vmem:[%s364 + $0x60] sm:$0xff] %v1213
        %1259 = vst [vmem:[%s364 + $0x68] sm:$0xff] %v1242
        %1260 = vst [vmem:[%s364 + $0x70] sm:$0xff] %v1215
        %1261 = vst [vmem:[%s364 + $0x78] sm:$0xff] %v1244
        %s1262 = sand.u32 %s154, 1
        %s1263 = scalar_lea.sflag [#allocation4], %s1262
        %s1264 = sand.u32 %s154, 1
        %s1265 = smul.addr %s1264, 128
        %s1266 = scalar_lea.vmem [#allocation11], %s1265
        %s1267 = sand.u32 %s180, 1
        %s1268 = scalar_lea.sflag [#allocation13], %s1267
        %s1269 = sand.u32 %s180, 1
        %s1270 = smul.addr %s1269, 256
        %s1271 = scalar_lea.vmem [#allocation12], %s1270
        // Predicated region
        $region61: #{tpu_custom_call.1} parent=39 // pred_check
          %p1272 = pneg %p164
        $region62: #{tpu_custom_call.1} parent=39 // pred_check_branch
          %1274 = sbr.rel (%p1272) target = $region64
        $region63: #{tpu_custom_call.1} parent=39 // pred_region
          %s1275 = smul.u32 8, %s31
          %1277 = vsyncadd %s1263, 0
          %s1278 = smul.addr %s1275, 2
          %s1279 = smul.addr %s1278, 8
          %s1280 = scalar_lea.hbm %s5, %s1279
          %s1281 = sshll.u32 %s1266, 4
          %s1282 = int_to_ptr.vmem [resolvable:$true] %s1281
          %s1283 = sshll.u32 %s1280, 4
          %s1284 = int_to_ptr.hbm [resolvable:$true] %s1283
          %1289 = dma.vmem_to_hbm [thread:$0]  %s1282, 2048, %s1284, %s1263, 256, 256, 16
        $region64: #{tpu_custom_call.1} parent=39 // pred_fallthru
          _
        // Predicated region
        $region65: #{tpu_custom_call.1} parent=39 // pred_check
          %p1290 = pneg %p190
        $region66: #{tpu_custom_call.1} parent=39 // pred_check_branch
          %1292 = sbr.rel (%p1290) target = $region68
        $region67: #{tpu_custom_call.1} parent=39 // pred_region
          %s1293 = smul.u32 8, %s31
          %1295 = vsyncadd %s1268, 0
          %s1296 = smul.addr %s1293, 4
          %s1297 = smul.addr %s1296, 8
          %s1298 = scalar_lea.hbm %s6, %s1297
          %s1299 = sshll.u32 %s1271, 4
          %s1300 = int_to_ptr.vmem [resolvable:$true] %s1299
          %s1301 = sshll.u32 %s1298, 4
          %s1302 = int_to_ptr.hbm [resolvable:$true] %s1301
          %1307 = dma.vmem_to_hbm [thread:$0]  %s1300, 4096, %s1302, %s1268, 512, 512, 32
        $region68: #{tpu_custom_call.1} parent=39 // pred_fallthru
          _
      $region40: #{tpu_custom_call.1} parent=5 // pred_fallthru
        _
      %p1308 = scmp.le.s32.totalorder 2, %s26
      // Predicated region
      $region69: #{tpu_custom_call.1} parent=5 // pred_check
        %p1309 = pneg %p1308
      $region70: #{tpu_custom_call.1} parent=5 // pred_check_branch
        %1311 = sbr.rel (%p1309) target = $region72
      $region71: #{tpu_custom_call.1} parent=5 // pred_region
        %s1312 = ssub.s32 %s26, 2
        // Predicated region
        $region73: #{tpu_custom_call.1} parent=71 // pred_check
          %p1313 = pneg %p170
        $region74: #{tpu_custom_call.1} parent=71 // pred_check_branch
          %1315 = sbr.rel (%p1313) target = $region76
        $region75: #{tpu_custom_call.1} parent=71 // pred_region
          %s1316 = sand.u32 %s155, 1
          %s1317 = scalar_lea.sflag [#allocation4], %s1316
          %s1318 = sand.u32 %s155, 1
          %s1319 = smul.addr %s1318, 128
          %s1320 = scalar_lea.vmem [#allocation11], %s1319
          %1322 = dma.done %s1317, 2048
        $region76: #{tpu_custom_call.1} parent=71 // pred_fallthru
          _
        // Predicated region
        $region77: #{tpu_custom_call.1} parent=71 // pred_check
          %p1323 = pneg %p196
        $region78: #{tpu_custom_call.1} parent=71 // pred_check_branch
          %1325 = sbr.rel (%p1323) target = $region80
        $region79: #{tpu_custom_call.1} parent=71 // pred_region
          %s1326 = sand.u32 %s181, 1
          %s1327 = scalar_lea.sflag [#allocation13], %s1326
          %s1328 = sand.u32 %s181, 1
          %s1329 = smul.addr %s1328, 256
          %s1330 = scalar_lea.vmem [#allocation12], %s1329
          %1332 = dma.done %s1327, 4096
        $region80: #{tpu_custom_call.1} parent=71 // pred_fallthru
          _
      $region72: #{tpu_custom_call.1} parent=5 // pred_fallthru
        _
    $region6: #{tpu_custom_call.1} parent=1 // loop_footer
      %s30 = sadd.s32 1, %s26
    $region7: #{tpu_custom_call.1} parent=1 // loop_footer_branch
      %25 = sbr.rel target = $region3
    $region8: #{tpu_custom_call.1} parent=1 // loop_exit
      _
    %1333 = vsyncpa [#allocation3], 1
    %s1334 = scalar_lea.sflag [#allocation3], 1
    %1335 = vsyncpa %s1334, 1
    %1336 = vsyncpa [#allocation6], 1
    %s1337 = scalar_lea.sflag [#allocation6], 1
    %1338 = vsyncpa %s1337, 1
    %1339 = vsyncpa [#allocation9], 1
    %1340 = vsyncpa [#allocation4], 1
    %s1341 = scalar_lea.sflag [#allocation4], 1
    %1342 = vsyncpa %s1341, 1
    %1343 = vsyncpa [#allocation13], 1
    %s1344 = scalar_lea.sflag [#allocation13], 1
    %1345 = vsyncpa %s1344, 1

</llo_original>
